<compile_context>
chip_gen: v7x
topology: tpu7x:2x2x1
jax: 0.10.0
libtpu: 0.0.40
codegen_flags: <defaults>
</compile_context>

<pallas_src>
import functools

import jax
import jax.numpy as jnp
import numpy as np
from jax.experimental import pallas as pl
from jax.experimental.pallas import tpu as pltpu

NEG_SLOPE = 0.01   # PyTorch nn.LeakyReLU default
HP = 128           # lane-padded hidden width (one full lane dim)


def _leaky(v):
    return jnp.where(v > 0, v, NEG_SLOPE * v)


def _round_up(n, m):
    return ((n + m - 1) // m) * m


# ------------------------------- kernel --------------------------------------

def _smlp_kernel(x_ref, w1_ref, wstk_ref, w4_ref, b123_ref, b4_ref, o_ref, *,
                 compute_dtype):
    cdt = compute_dtype
    b = b123_ref[...]                                     # (3, HP) f32

    # Layer 1 in f32 (encode affine already folded into w1/b1; K = D_in tiny).
    h = _leaky(jnp.dot(x_ref[...], w1_ref[...],
                       preferred_element_type=jnp.float32) + b[0:1, :])

    # Hidden layers 2 & 3: compute_dtype operands on the MXU, f32 accumulation.
    h = _leaky(jnp.dot(h.astype(cdt), wstk_ref[0],
                       preferred_element_type=jnp.float32) + b[1:2, :])
    h = _leaky(jnp.dot(h.astype(cdt), wstk_ref[1],
                       preferred_element_type=jnp.float32) + b[2:3, :])

    # Output layer: narrow (tb, D_out) store -> minimal output HBM traffic.
    o_ref[...] = (jnp.dot(h.astype(cdt), w4_ref[...],
                          preferred_element_type=jnp.float32) + b4_ref[...])


# ------------------------- one-time weight prepack ----------------------------

def smlp_prepack(xmin, xmax, params, *, compute_dtype=jnp.bfloat16):
    """Fold the encode affine into layer 1 and pack/pad/cast all weights once.

    params use the PyTorch layout: w{i}: (out, in), b{i}: (out,).
    """
    f32 = jnp.float32
    xmin = jnp.asarray(xmin, f32)
    xmax = jnp.asarray(xmax, f32)

    # encode: (x - xmin)/(xmax - xmin) - 0.5  ==  x*s - c  with:
    s = 1.0 / (xmax - xmin)                       # (D_in,)
    c = xmin * s + 0.5                            # (D_in,)

    w1t = jnp.asarray(params["w1"], f32).T        # (D_in, H1)
    b1f = jnp.asarray(params["b1"], f32) - c @ w1t

    D_in, H1 = w1t.shape
    H2 = params["w2"].shape[0]
    H3 = params["w3"].shape[0]
    D_out = params["w4"].shape[0]
    assert max(H1, H2, H3) <= HP and params["w4"].shape[1] <= HP

    # Layer 1 stays f32 (precision of the folded affine).
    w1p = jnp.zeros((D_in, HP), f32).at[:, :H1].set(s[:, None] * w1t)

    def pad_sq(w):                                # torch (out, in) -> (HP, HP)
        wt = jnp.asarray(w, f32).T
        return jnp.zeros((HP, HP), f32).at[:wt.shape[0], :wt.shape[1]].set(wt)

    wstk = jnp.stack([pad_sq(params["w2"]),
                      pad_sq(params["w3"])]).astype(compute_dtype)  # (2,HP,HP)

    w4t = jnp.asarray(params["w4"], f32).T        # (H3, D_out)
    w4p = (jnp.zeros((HP, D_out), f32).at[:w4t.shape[0], :].set(w4t)
           .astype(compute_dtype))                # (HP, D_out)

    def pad_b(bv):
        bv = jnp.asarray(bv, f32)
        return jnp.zeros((HP,), f32).at[:bv.shape[0]].set(bv)

    b123 = jnp.stack([pad_b(b1f), pad_b(params["b2"]), pad_b(params["b3"])])
    b4 = jnp.asarray(params["b4"], f32)[None, :]  # (1, D_out)

    return dict(w1p=w1p, wstk=wstk, w4p=w4p, b123=b123, b4=b4,
                D_in=D_in, D_out=D_out, compute_dtype=compute_dtype)


# ------------------------------- hot path -------------------------------------

def smlp_forward_packed(x, packed, *, tb=1024):
    """x: (B, D_in) -> (B, D_out). `packed` comes from smlp_prepack()."""
    B, D_in = x.shape
    assert D_in == packed["D_in"]
    D_out = packed["D_out"]
    cdt = packed["compute_dtype"]

    x = x.astype(jnp.float32)   # layer 1 runs in f32 (see prepack comment)

    # Batch tile: multiple of 8; large by default to amortize the ~0.35 us
    # per-grid-step overhead. Keep >= 2 grid steps when possible so v7x's two
    # TensorCores both get work ("parallel" axis; no-op on v5e/v6e).
    tb = max(8, min(_round_up(tb, 8), _round_up(B, 8)))
    if pl.cdiv(B, tb) < 2 and B > 8:
        tb = _round_up(pl.cdiv(B, 2), 8)
    grid = (pl.cdiv(B, tb),)   # ragged last tile handled by Pallas bounds masking

    kernel = functools.partial(_smlp_kernel, compute_dtype=cdt)
    res2 = lambda i: (0, 0)

    y = pl.pallas_call(
        kernel,
        out_shape=jax.ShapeDtypeStruct((B, D_out), jnp.float32),
        grid=grid,
        in_specs=[
            pl.BlockSpec((tb, D_in), lambda i: (i, 0)),       # streamed x (f32)
            pl.BlockSpec((D_in, HP), res2),                   # resident W1' (f32)
            pl.BlockSpec((2, HP, HP), lambda i: (0, 0, 0)),   # resident W2,W3
            pl.BlockSpec((HP, D_out), res2),                  # resident W4
            pl.BlockSpec((3, HP), res2),                      # resident b1..b3
            pl.BlockSpec((1, D_out), res2),                   # resident b4
        ],
        out_specs=pl.BlockSpec((tb, D_out), lambda i: (i, 0)),  # narrow output
        compiler_params=pltpu.CompilerParams(
            dimension_semantics=("parallel",)),               # v7x: 2 TCs
    )(x, packed["w1p"], packed["wstk"], packed["w4p"], packed["b123"],
      packed["b4"])
    return y


def smlp_forward(x, xmin, xmax, params, *, tb=1024,
                 compute_dtype=jnp.bfloat16):
    """Convenience wrapper (packs every call). Prefer prepack + forward_packed."""
    packed = smlp_prepack(xmin, xmax, params, compute_dtype=compute_dtype)
    return smlp_forward_packed(x, packed, tb=tb)


# --------------------------- reference & self-test ----------------------------

def _init_linear(key, d_in, d_out):
    kw, kb = jax.random.split(key)
    bound = 1.0 / np.sqrt(d_in)
    w = jax.random.uniform(kw, (d_out, d_in), jnp.float32, -bound, bound)
    b = jax.random.uniform(kb, (d_out,), jnp.float32, -bound, bound)
    return w, b


def _reference_np(x, xmin, xmax, params):
    x = np.asarray(x, np.float64)
    xe = (x - np.asarray(xmin, np.float64)) / (
        np.asarray(xmax, np.float64) - np.asarray(xmin, np.float64)) - 0.5
    h = xe
    for i in (1, 2, 3):
        h = h @ np.asarray(params[f"w{i}"], np.float64).T + np.asarray(
            params[f"b{i}"], np.float64)
        h = np.where(h > 0, h, NEG_SLOPE * h)
    return h @ np.asarray(params["w4"], np.float64).T + np.asarray(
        params["b4"], np.float64)


if __name__ == "__main__":
    # Small shapes consistent with SMLP(D_in, H1, H2, H3, D_out, xmin, xmax);
    # B is a non-multiple of the batch tile to exercise the ragged final tile.
    B, D_in, H1, H2, H3, D_out = 300, 16, 32, 32, 32, 8

    key = jax.random.PRNGKey(0)
    k_x, k_bounds, k1, k2, k3, k4 = jax.random.split(key, 6)

    x = jax.random.normal(k_x, (B, D_in), jnp.float32) * 3.0 + 1.0
    xmin = jnp.full((D_in,), -5.0, jnp.float32)
    xmax = jnp.full((D_in,), 5.0, jnp.float32) + jax.random.uniform(
        k_bounds, (D_in,), jnp.float32, 0.0, 1.0)

    params = {}
    params["w1"], params["b1"] = _init_linear(k1, D_in, H1)
    params["w2"], params["b2"] = _init_linear(k2, H1, H2)
    params["w3"], params["b3"] = _init_linear(k3, H2, H3)
    params["w4"], params["b4"] = _init_linear(k4, H3, D_out)

    y_ref = _reference_np(x, xmin, xmax, params)

    # f32 path (tight check), small tile -> 3 grid steps incl. ragged last tile.
    packed_f32 = smlp_prepack(xmin, xmax, params, compute_dtype=jnp.float32)
    y32 = jax.block_until_ready(smlp_forward_packed(x, packed_f32, tb=128))
    np.testing.assert_allclose(np.asarray(y32), y_ref, rtol=2e-3, atol=2e-3)

    # Default bf16 path (layers 2..4 bf16, f32 accumulation), default tb
    # exercises the >=2-grid-step clamp.
    packed_bf16 = smlp_prepack(xmin, xmax, params)          # bf16 default
    ybf = jax.block_until_ready(smlp_forward_packed(x, packed_bf16))
    np.testing.assert_allclose(np.asarray(ybf), y_ref, rtol=5e-2, atol=5e-2)

    print("KERNEL_OK")
</pallas_src>

<mosaic_0001>
module attributes {stable_mosaic.version = 11 : i64} {
  func.func @_smlp_kernel(%arg0: i32, %arg1: memref<128x16xf32, #tpu.memory_space<vmem>>, %arg2: memref<16x128xf32, #tpu.memory_space<vmem>>, %arg3: memref<2x128x128xf32, #tpu.memory_space<vmem>>, %arg4: memref<128x8xf32, #tpu.memory_space<vmem>>, %arg5: memref<3x128xf32, #tpu.memory_space<vmem>>, %arg6: memref<1x8xf32, #tpu.memory_space<vmem>>, %arg7: memref<128x8xf32, #tpu.memory_space<vmem>>) attributes {dimension_semantics = [#tpu.dimension_semantics<parallel>], iteration_bounds = array<i64: 3>, scalar_prefetch = 0 : i64, scratch_operands = 0 : i64, tpu.core_type = #tpu.core_type<tc>, window_params = [{transform_indices = @transform_0, window_bounds = array<i64: 128, 16>}, {pipeline_mode = #tpu.pipeline_mode<synchronous>, transform_indices = @transform_1, window_bounds = array<i64: 16, 128>}, {pipeline_mode = #tpu.pipeline_mode<synchronous>, transform_indices = @transform_2, window_bounds = array<i64: 2, 128, 128>}, {pipeline_mode = #tpu.pipeline_mode<synchronous>, transform_indices = @transform_3, window_bounds = array<i64: 128, 8>}, {pipeline_mode = #tpu.pipeline_mode<synchronous>, transform_indices = @transform_4, window_bounds = array<i64: 3, 128>}, {pipeline_mode = #tpu.pipeline_mode<synchronous>, transform_indices = @transform_5, window_bounds = array<i64: 1, 8>}, {transform_indices = @transform_6, window_bounds = array<i64: 128, 8>}]} {
    %c0 = arith.constant 0 : index
    %c0_0 = arith.constant 0 : index
    %0 = vector.load %arg5[%c0, %c0_0] : memref<3x128xf32, #tpu.memory_space<vmem>>, vector<3x128xf32>
    %c0_1 = arith.constant 0 : index
    %c0_2 = arith.constant 0 : index
    %1 = vector.load %arg1[%c0_1, %c0_2] : memref<128x16xf32, #tpu.memory_space<vmem>>, vector<128x16xf32>
    %c0_3 = arith.constant 0 : index
    %c0_4 = arith.constant 0 : index
    %2 = vector.load %arg2[%c0_3, %c0_4] : memref<16x128xf32, #tpu.memory_space<vmem>>, vector<16x128xf32>
    %cst = arith.constant dense<0.000000e+00> : vector<128x128xf32>
    %3 = tpu.matmul %1, %2, %cst {dimension_numbers = #tpu.dot_dimension_numbers<[1], [0], [0], [1], [0, 0, 1, 1], [], []>} : vector<128x16xf32>, vector<16x128xf32>, vector<128x128xf32> -> vector<128x128xf32>
    %4 = vector.extract_strided_slice %0 {offsets = [0, 0], sizes = [1, 128], strides = [1, 1]} : vector<3x128xf32> to vector<1x128xf32>
    %5 = vector.broadcast %4 : vector<1x128xf32> to vector<128x128xf32>
    %6 = arith.addf %3, %5 : vector<128x128xf32>
    %cst_5 = arith.constant 0.000000e+00 : f32
    %7 = vector.broadcast %cst_5 : f32 to vector<128x128xf32>
    %8 = arith.cmpf ogt, %6, %7 : vector<128x128xf32>
    %cst_6 = arith.constant 0.00999999977 : f32
    %9 = vector.broadcast %cst_6 : f32 to vector<128x128xf32>
    %10 = arith.mulf %9, %6 : vector<128x128xf32>
    %11 = arith.select %8, %6, %10 : vector<128x128xi1>, vector<128x128xf32>
    %c0_7 = arith.constant 0 : index
    %c0_8 = arith.constant 0 : index
    %c0_9 = arith.constant 0 : index
    %12 = vector.load %arg3[%c0_7, %c0_8, %c0_9] : memref<2x128x128xf32, #tpu.memory_space<vmem>>, vector<1x128x128xf32>
    %13 = vector.shape_cast %12 : vector<1x128x128xf32> to vector<128x128xf32>
    %cst_10 = arith.constant dense<0.000000e+00> : vector<128x128xf32>
    %14 = tpu.matmul %11, %13, %cst_10 {dimension_numbers = #tpu.dot_dimension_numbers<[1], [0], [0], [1], [0, 0, 1, 1], [], []>} : vector<128x128xf32>, vector<128x128xf32>, vector<128x128xf32> -> vector<128x128xf32>
    %15 = vector.extract_strided_slice %0 {offsets = [1, 0], sizes = [1, 128], strides = [1, 1]} : vector<3x128xf32> to vector<1x128xf32>
    %16 = vector.broadcast %15 : vector<1x128xf32> to vector<128x128xf32>
    %17 = arith.addf %14, %16 : vector<128x128xf32>
    %cst_11 = arith.constant 0.000000e+00 : f32
    %18 = vector.broadcast %cst_11 : f32 to vector<128x128xf32>
    %19 = arith.cmpf ogt, %17, %18 : vector<128x128xf32>
    %cst_12 = arith.constant 0.00999999977 : f32
    %20 = vector.broadcast %cst_12 : f32 to vector<128x128xf32>
    %21 = arith.mulf %20, %17 : vector<128x128xf32>
    %22 = arith.select %19, %17, %21 : vector<128x128xi1>, vector<128x128xf32>
    %c1 = arith.constant 1 : index
    %c0_13 = arith.constant 0 : index
    %c0_14 = arith.constant 0 : index
    %23 = vector.load %arg3[%c1, %c0_13, %c0_14] : memref<2x128x128xf32, #tpu.memory_space<vmem>>, vector<1x128x128xf32>
    %24 = vector.shape_cast %23 : vector<1x128x128xf32> to vector<128x128xf32>
    %cst_15 = arith.constant dense<0.000000e+00> : vector<128x128xf32>
    %25 = tpu.matmul %22, %24, %cst_15 {dimension_numbers = #tpu.dot_dimension_numbers<[1], [0], [0], [1], [0, 0, 1, 1], [], []>} : vector<128x128xf32>, vector<128x128xf32>, vector<128x128xf32> -> vector<128x128xf32>
    %26 = vector.extract_strided_slice %0 {offsets = [2, 0], sizes = [1, 128], strides = [1, 1]} : vector<3x128xf32> to vector<1x128xf32>
    %27 = vector.broadcast %26 : vector<1x128xf32> to vector<128x128xf32>
    %28 = arith.addf %25, %27 : vector<128x128xf32>
    %cst_16 = arith.constant 0.000000e+00 : f32
    %29 = vector.broadcast %cst_16 : f32 to vector<128x128xf32>
    %30 = arith.cmpf ogt, %28, %29 : vector<128x128xf32>
    %cst_17 = arith.constant 0.00999999977 : f32
    %31 = vector.broadcast %cst_17 : f32 to vector<128x128xf32>
    %32 = arith.mulf %31, %28 : vector<128x128xf32>
    %33 = arith.select %30, %28, %32 : vector<128x128xi1>, vector<128x128xf32>
    %c0_18 = arith.constant 0 : index
    %c0_19 = arith.constant 0 : index
    %34 = vector.load %arg4[%c0_18, %c0_19] : memref<128x8xf32, #tpu.memory_space<vmem>>, vector<128x8xf32>
    %cst_20 = arith.constant dense<0.000000e+00> : vector<128x8xf32>
    %35 = tpu.matmul %33, %34, %cst_20 {dimension_numbers = #tpu.dot_dimension_numbers<[1], [0], [0], [1], [0, 0, 1, 1], [], []>} : vector<128x128xf32>, vector<128x8xf32>, vector<128x8xf32> -> vector<128x8xf32>
    %c0_21 = arith.constant 0 : index
    %c0_22 = arith.constant 0 : index
    %36 = vector.load %arg6[%c0_21, %c0_22] : memref<1x8xf32, #tpu.memory_space<vmem>>, vector<1x8xf32>
    %37 = vector.broadcast %36 : vector<1x8xf32> to vector<128x8xf32>
    %38 = arith.addf %35, %37 : vector<128x8xf32>
    %c0_23 = arith.constant 0 : index
    %c0_24 = arith.constant 0 : index
    %39 = vector.load %arg7[%c0_23, %c0_24] : memref<128x8xf32, #tpu.memory_space<vmem>>, vector<128x8xf32>
    tpu.vector_store %arg7[%c0_23, %c0_24], %38 {strides = array<i32>} : memref<128x8xf32, #tpu.memory_space<vmem>>, vector<128x8xf32>,
    return
  }
  func.func @transform_0(%arg0: i32) -> (i32, i32) {
    %c0_i32 = arith.constant 0 : i32
    %c0_i32_0 = arith.constant 0 : i32
    return %arg0, %c0_i32 : i32, i32
  }
  func.func @transform_1(%arg0: i32) -> (i32, i32) {
    %c0_i32 = arith.constant 0 : i32
    %c0_i32_0 = arith.constant 0 : i32
    %c0_i32_1 = arith.constant 0 : i32
    return %c0_i32, %c0_i32_0 : i32, i32
  }
  func.func @transform_2(%arg0: i32) -> (i32, i32, i32) {
    %c0_i32 = arith.constant 0 : i32
    %c0_i32_0 = arith.constant 0 : i32
    %c0_i32_1 = arith.constant 0 : i32
    %c0_i32_2 = arith.constant 0 : i32
    return %c0_i32, %c0_i32_0, %c0_i32_1 : i32, i32, i32
  }
  func.func @transform_3(%arg0: i32) -> (i32, i32) {
    %c0_i32 = arith.constant 0 : i32
    %c0_i32_0 = arith.constant 0 : i32
    %c0_i32_1 = arith.constant 0 : i32
    return %c0_i32, %c0_i32_0 : i32, i32
  }
  func.func @transform_4(%arg0: i32) -> (i32, i32) {
    %c0_i32 = arith.constant 0 : i32
    %c0_i32_0 = arith.constant 0 : i32
    %c0_i32_1 = arith.constant 0 : i32
    return %c0_i32, %c0_i32_0 : i32, i32
  }
  func.func @transform_5(%arg0: i32) -> (i32, i32) {
    %c0_i32 = arith.constant 0 : i32
    %c0_i32_0 = arith.constant 0 : i32
    %c0_i32_1 = arith.constant 0 : i32
    return %c0_i32, %c0_i32_0 : i32, i32
  }
  func.func @transform_6(%arg0: i32) -> (i32, i32) {
    %c0_i32 = arith.constant 0 : i32
    %c0_i32_0 = arith.constant 0 : i32
    return %arg0, %c0_i32 : i32, i32
  }
}

</mosaic_0001>

<llo_original>
// kernel: tpu_custom_call.1
$region0: #{tpu_custom_call.1}
  #allocation0 [shape = 'u32[]', space=smem, size = 0x4, offset = 0x4, fixed_abs, tag = 'smem constant byte address 0x4 - core index']
  #allocation1 [shape = 'u32[144,128]{1,0:T(1,128)}', space=vmem, size = 0x12000, scoped, tag = 'internal scratch']
  %s0 = inlined_call_operand.vmem [shape: f32[300,16], index: 0, kind: input, shape index: {}]
  %s1 = inlined_call_operand.vmem [shape: f32[16,128], index: 1, kind: input, shape index: {}]
  %s2 = inlined_call_operand.vmem [shape: f32[2,128,128], index: 2, kind: input, shape index: {}]
  %s3 = inlined_call_operand.vmem [shape: f32[128,8], index: 3, kind: input, shape index: {}]
  %s4 = inlined_call_operand.vmem [shape: f32[3,128], index: 4, kind: input, shape index: {}]
  %s5 = inlined_call_operand.vmem [shape: f32[1,8], index: 5, kind: input, shape index: {}]
  %s6 = inlined_call_operand.vmem [shape: f32[300,8], index: 6, kind: output, shape index: {}]
  %s7 = sld [smem:[#allocation0]]
  $region105: #{tpu_custom_call.1} parent=0
    _
  %s9 = ssub.s32 1, %s7
  %s10 = scalar_select 0, %s9, %s7
  $region1: #{tpu_custom_call.1} parent=0
    #allocation2 [shape = 'u8[131072]{0}', space=vmem, size = 0x20000, scoped, tag = 'output window, operand 0']
    loop: start=0, step=1, limit=5
    $region2: #{tpu_custom_call.1} parent=1 // loop_pre_header
      _
    $region3: #{tpu_custom_call.1} parent=1 // loop_header
      %s12 = sphi 0, %s16
      %p13 = scmp.ge.s32.totalorder %s12, 5
      %s22 = sphi 0, %s24
      %s25 = sphi 0, %s22
      %s26 = sphi 0, %s25
      %s42 = sphi 0, %s26
      %s46 = sphi 0, %s46
      %s48 = sphi 0, %s46
      %s49 = sphi 0, %s48
      %s63 = sphi 0, %s49
      %s67 = sphi 0, %s67
      %s69 = sphi 0, %s67
      %s70 = sphi 0, %s69
      %s84 = sphi 0, %s70
      %s88 = sphi 0, %s88
      %s90 = sphi 0, %s88
      %s91 = sphi 0, %s90
      %s105 = sphi 0, %s91
      %s109 = sphi 0, %s109
      %s111 = sphi 0, %s109
      %s112 = sphi 0, %s111
      %s126 = sphi 0, %s112
      %s130 = sphi 0, %s130
      %s132 = sphi 0, %s130
      %s133 = sphi 0, %s132
      %s147 = sphi 0, %s133
      %s153 = sphi 0, %s155
      %s156 = sphi 0, %s153
      %s157 = sphi 0, %s156
      %s173 = sphi 0, %s157
    $region4: #{tpu_custom_call.1} parent=1 // loop_header_branch
      %15 = sbr.rel (%p13) target = $region8
    $region5: #{tpu_custom_call.1} parent=1 // loop_body
      %s17 = ssub.s32 %s12, 1
      %s18 = ssub.s32 %s12, 2
      %s19 = sadd.s32 %s12, 1
      %s20 = ssub.s32 %s12, %s19
      %p21 = scmp.eq.s32.totalorder %s20, 0
      %s23 = sadd.s32 %s22, 1
      %s24 = scalar_select %p21, %s22, %s23
      %p27 = pneg %p21
      %p28 = scmp.eq.s32.totalorder %s12, 2
      %p29 = por %p27, %p28
      %p30 = scmp.ne.s32.totalorder %s22, %s25
      %p31 = scmp.eq.s32.totalorder %s12, 0
      %p32 = por %p30, %p31
      %p33 = scmp.ne.s32.totalorder %s22, %s25
      %p34 = scmp.eq.s32.totalorder %s17, 2
      %p35 = por %p33, %p34
      %p36 = scmp.ne.s32.totalorder %s25, %s26
      %p37 = scmp.eq.s32.totalorder %s17, 0
      %p38 = por %p36, %p37
      %p39 = scmp.ne.s32.totalorder %s25, %s26
      %p40 = scmp.eq.s32.totalorder %s18, 2
      %p41 = por %p39, %p40
      %p43 = scmp.ne.s32.totalorder %s26, %s42
      %p44 = scmp.eq.s32.totalorder %s18, 0
      %p45 = por %p43, %p44
      %s47 = sadd.s32 %s46, 1
      %p50 = scmp.eq.s32.totalorder %s12, 2
      %p51 = scmp.ne.s32.totalorder %s46, %s48
      %p52 = scmp.eq.s32.totalorder %s12, 0
      %p53 = por %p51, %p52
      %p54 = scmp.ne.s32.totalorder %s46, %s48
      %p55 = scmp.eq.s32.totalorder %s17, 2
      %p56 = por %p54, %p55
      %p57 = scmp.ne.s32.totalorder %s48, %s49
      %p58 = scmp.eq.s32.totalorder %s17, 0
      %p59 = por %p57, %p58
      %p60 = scmp.ne.s32.totalorder %s48, %s49
      %p61 = scmp.eq.s32.totalorder %s18, 2
      %p62 = por %p60, %p61
      %p64 = scmp.ne.s32.totalorder %s49, %s63
      %p65 = scmp.eq.s32.totalorder %s18, 0
      %p66 = por %p64, %p65
      %s68 = sadd.s32 %s67, 1
      %p71 = scmp.eq.s32.totalorder %s12, 2
      %p72 = scmp.ne.s32.totalorder %s67, %s69
      %p73 = scmp.eq.s32.totalorder %s12, 0
      %p74 = por %p72, %p73
      %p75 = scmp.ne.s32.totalorder %s67, %s69
      %p76 = scmp.eq.s32.totalorder %s17, 2
      %p77 = por %p75, %p76
      %p78 = scmp.ne.s32.totalorder %s69, %s70
      %p79 = scmp.eq.s32.totalorder %s17, 0
      %p80 = por %p78, %p79
      %p81 = scmp.ne.s32.totalorder %s69, %s70
      %p82 = scmp.eq.s32.totalorder %s18, 2
      %p83 = por %p81, %p82
      %p85 = scmp.ne.s32.totalorder %s70, %s84
      %p86 = scmp.eq.s32.totalorder %s18, 0
      %p87 = por %p85, %p86
      %s89 = sadd.s32 %s88, 1
      %p92 = scmp.eq.s32.totalorder %s12, 2
      %p93 = scmp.ne.s32.totalorder %s88, %s90
      %p94 = scmp.eq.s32.totalorder %s12, 0
      %p95 = por %p93, %p94
      %p96 = scmp.ne.s32.totalorder %s88, %s90
      %p97 = scmp.eq.s32.totalorder %s17, 2
      %p98 = por %p96, %p97
      %p99 = scmp.ne.s32.totalorder %s90, %s91
      %p100 = scmp.eq.s32.totalorder %s17, 0
      %p101 = por %p99, %p100
      %p102 = scmp.ne.s32.totalorder %s90, %s91
      %p103 = scmp.eq.s32.totalorder %s18, 2
      %p104 = por %p102, %p103
      %p106 = scmp.ne.s32.totalorder %s91, %s105
      %p107 = scmp.eq.s32.totalorder %s18, 0
      %p108 = por %p106, %p107
      %s110 = sadd.s32 %s109, 1
      %p113 = scmp.eq.s32.totalorder %s12, 2
      %p114 = scmp.ne.s32.totalorder %s109, %s111
      %p115 = scmp.eq.s32.totalorder %s12, 0
      %p116 = por %p114, %p115
      %p117 = scmp.ne.s32.totalorder %s109, %s111
      %p118 = scmp.eq.s32.totalorder %s17, 2
      %p119 = por %p117, %p118
      %p120 = scmp.ne.s32.totalorder %s111, %s112
      %p121 = scmp.eq.s32.totalorder %s17, 0
      %p122 = por %p120, %p121
      %p123 = scmp.ne.s32.totalorder %s111, %s112
      %p124 = scmp.eq.s32.totalorder %s18, 2
      %p125 = por %p123, %p124
      %p127 = scmp.ne.s32.totalorder %s112, %s126
      %p128 = scmp.eq.s32.totalorder %s18, 0
      %p129 = por %p127, %p128
      %s131 = sadd.s32 %s130, 1
      %p134 = scmp.eq.s32.totalorder %s12, 2
      %p135 = scmp.ne.s32.totalorder %s130, %s132
      %p136 = scmp.eq.s32.totalorder %s12, 0
      %p137 = por %p135, %p136
      %p138 = scmp.ne.s32.totalorder %s130, %s132
      %p139 = scmp.eq.s32.totalorder %s17, 2
      %p140 = por %p138, %p139
      %p141 = scmp.ne.s32.totalorder %s132, %s133
      %p142 = scmp.eq.s32.totalorder %s17, 0
      %p143 = por %p141, %p142
      %p144 = scmp.ne.s32.totalorder %s132, %s133
      %p145 = scmp.eq.s32.totalorder %s18, 2
      %p146 = por %p144, %p145
      %p148 = scmp.ne.s32.totalorder %s133, %s147
      %p149 = scmp.eq.s32.totalorder %s18, 0
      %p150 = por %p148, %p149
      %s151 = ssub.s32 %s12, %s19
      %p152 = scmp.eq.s32.totalorder %s151, 0
      %s154 = sadd.s32 %s153, 1
      %s155 = scalar_select %p152, %s153, %s154
      %p158 = pneg %p152
      %p159 = scmp.eq.s32.totalorder %s12, 2
      %p160 = por %p158, %p159
      %p161 = scmp.ne.s32.totalorder %s153, %s156
      %p162 = scmp.eq.s32.totalorder %s12, 0
      %p163 = por %p161, %p162
      %p164 = scmp.ne.s32.totalorder %s153, %s156
      %p165 = scmp.eq.s32.totalorder %s17, 2
      %p166 = por %p164, %p165
      %p167 = scmp.ne.s32.totalorder %s156, %s157
      %p168 = scmp.eq.s32.totalorder %s17, 0
      %p169 = por %p167, %p168
      %p170 = scmp.ne.s32.totalorder %s156, %s157
      %p171 = scmp.eq.s32.totalorder %s18, 2
      %p172 = por %p170, %p171
      %p174 = scmp.ne.s32.totalorder %s157, %s173
      %p175 = scmp.eq.s32.totalorder %s18, 0
      %p176 = por %p174, %p175
      %p177 = scmp.le.s32.totalorder 1, %s12
      %p178 = scmp.lt.s32.totalorder %s12, 4
      %p179 = pnand %p177, %p178
      %p180 = pneg %p179
      // Predicated region
      $region9: #{tpu_custom_call.1} parent=5 // pred_check
        _
      $region10: #{tpu_custom_call.1} parent=5 // pred_check_branch
        %182 = sbr.rel (%p179) target = $region12
      $region11: #{tpu_custom_call.1} parent=5 // pred_region
        %s183 = ssub.s32 %s12, 1
        // Predicated region
        $region13: #{tpu_custom_call.1} parent=11 // pred_check
          %p184 = pneg %p59
        $region14: #{tpu_custom_call.1} parent=11 // pred_check_branch
          %186 = sbr.rel (%p184) target = $region16
        $region15: #{tpu_custom_call.1} parent=11 // pred_region
          _
        $region16: #{tpu_custom_call.1} parent=11 // pred_fallthru
          _
        // Predicated region
        $region17: #{tpu_custom_call.1} parent=11 // pred_check
          %p187 = pneg %p80
        $region18: #{tpu_custom_call.1} parent=11 // pred_check_branch
          %189 = sbr.rel (%p187) target = $region20
        $region19: #{tpu_custom_call.1} parent=11 // pred_region
          _
        $region20: #{tpu_custom_call.1} parent=11 // pred_fallthru
          _
        // Predicated region
        $region21: #{tpu_custom_call.1} parent=11 // pred_check
          %p190 = pneg %p101
        $region22: #{tpu_custom_call.1} parent=11 // pred_check_branch
          %192 = sbr.rel (%p190) target = $region24
        $region23: #{tpu_custom_call.1} parent=11 // pred_region
          _
        $region24: #{tpu_custom_call.1} parent=11 // pred_fallthru
          _
        // Predicated region
        $region25: #{tpu_custom_call.1} parent=11 // pred_check
          %p193 = pneg %p122
        $region26: #{tpu_custom_call.1} parent=11 // pred_check_branch
          %195 = sbr.rel (%p193) target = $region28
        $region27: #{tpu_custom_call.1} parent=11 // pred_region
          _
        $region28: #{tpu_custom_call.1} parent=11 // pred_fallthru
          _
        // Predicated region
        $region29: #{tpu_custom_call.1} parent=11 // pred_check
          %p196 = pneg %p143
        $region30: #{tpu_custom_call.1} parent=11 // pred_check_branch
          %198 = sbr.rel (%p196) target = $region32
        $region31: #{tpu_custom_call.1} parent=11 // pred_region
          _
        $region32: #{tpu_custom_call.1} parent=11 // pred_fallthru
          _
      $region12: #{tpu_custom_call.1} parent=5 // pred_fallthru
        _
      %p199 = scmp.lt.s32.totalorder %s12, 3
      // Predicated region
      $region33: #{tpu_custom_call.1} parent=5 // pred_check
        %p200 = pneg %p199
      $region34: #{tpu_custom_call.1} parent=5 // pred_check_branch
        %202 = sbr.rel (%p200) target = $region36
      $region35: #{tpu_custom_call.1} parent=5 // pred_region
        // Predicated region
        $region37: #{tpu_custom_call.1} parent=35 // pred_check
          %p203 = pneg %p32
        $region38: #{tpu_custom_call.1} parent=35 // pred_check_branch
          %205 = sbr.rel (%p203) target = $region40
        $region39: #{tpu_custom_call.1} parent=35 // pred_region
          %s206 = smul.u32 16, %s12
          %s207 = ssub.s32 38, %s206
          %p208 = scmp.lt.s32.totalorder %s207, 16
          %s209 = scalar_select %p208, %s207, 16
          %s210 = smul.u32 128, %s209
          %p211 = scmp.lt.s32.totalorder %s206, 37
          %s212 = scalar_select %p211, %s206, 37
          %s213 = smul.addr %s212, 8
          %s214 = scalar_lea.vmem %s0, %s213
          %s215 = smul.u32 16, %s12
          %s216 = ssub.s32 38, %s215
          %p217 = scmp.lt.s32.totalorder %s216, 16
          %s218 = scalar_select %p217, %s216, 16
          %s219 = smul.u32 128, %s218
        $region40: #{tpu_custom_call.1} parent=35 // pred_fallthru
          _
      $region36: #{tpu_custom_call.1} parent=5 // pred_fallthru
        _
      %p220 = scmp.le.s32.totalorder 1, %s12
      %p221 = scmp.lt.s32.totalorder %s12, 4
      %p222 = pnand %p220, %p221
      %p223 = pneg %p222
      // Predicated region
      $region41: #{tpu_custom_call.1} parent=5 // pred_check
        _
      $region42: #{tpu_custom_call.1} parent=5 // pred_check_branch
        %225 = sbr.rel (%p222) target = $region44
      $region43: #{tpu_custom_call.1} parent=5 // pred_region
        %s226 = ssub.s32 %s12, 1
        %s227 = smul.u32 16, %s17
        %s228 = ssub.s32 38, %s227
        %p229 = scmp.lt.s32.totalorder %s228, 16
        %s230 = scalar_select %p229, %s228, 16
        %s231 = smul.u32 128, %s230
        %p232 = scmp.lt.s32.totalorder %s227, 37
        %s233 = scalar_select %p232, %s227, 37
        %s234 = smul.addr %s233, 8
        %s235 = scalar_lea.vmem %s0, %s234
        %p236 = pneg %p38
        %p237 = pneg %p35
        %p238 = pneg %p59
        %p239 = pneg %p56
        %p240 = pneg %p80
        %p241 = pneg %p77
        %p242 = pneg %p101
        %p243 = pneg %p98
        %p244 = pneg %p122
        %p245 = pneg %p119
        %p246 = pneg %p143
        %p247 = pneg %p140
        %p248 = pneg %p169
        %p249 = pneg %p166
        %s250 = sand.u32 %s156, 1
        %s251 = sand.u32 %s156, 1
        %s252 = smul.addr %s251, 128
        %s253 = scalar_lea.vmem [#allocation2], %s252
        %s254 = smul.u32 16, %s17
        %s255 = ssub.s32 38, %s254
        %p256 = scmp.lt.s32.totalorder %s255, 16
        %s257 = scalar_select %p256, %s255, 16
        %s258 = smul.u32 128, %s257
        %p259 = scmp.lt.s32.totalorder %s254, 37
        %s260 = scalar_select %p259, %s254, 37
        %s261 = smul.addr %s260, 8
        %s262 = scalar_lea.vmem %s0, %s261
        %s263 = smul.u32 16, %s17
        %s264 = ssub.s32 38, %s263
        %p265 = scmp.lt.s32.totalorder %s264, 16
        %s266 = scalar_select %p265, %s264, 16
        %s267 = smul.u32 128, %s266
        %s268 = smul.u32 16, %s17
        %s269 = ssub.s32 38, %s268
        %p270 = scmp.lt.s32.totalorder %s269, 16
        %s271 = scalar_select %p270, %s269, 16
        %s272 = smul.u32 128, %s271
        %v273 = vld [vmem:[%s4] sm:$0x7]
        %v274 = vld [vmem:[%s262] sm:$0xff]
        %v275 = vld [vmem:[%s262 + $0x8] sm:$0xff]
        %v276 = vld [vmem:[%s262 + $0x10] sm:$0xff]
        %v277 = vld [vmem:[%s262 + $0x18] sm:$0xff]
        %v278 = vld [vmem:[%s262 + $0x20] sm:$0xff]
        %v279 = vld [vmem:[%s262 + $0x28] sm:$0xff]
        %v280 = vld [vmem:[%s262 + $0x30] sm:$0xff]
        %v281 = vld [vmem:[%s262 + $0x38] sm:$0xff]
        %v282 = vld [vmem:[%s262 + $0x40] sm:$0xff]
        %v283 = vld [vmem:[%s262 + $0x48] sm:$0xff]
        %v284 = vld [vmem:[%s262 + $0x50] sm:$0xff]
        %v285 = vld [vmem:[%s262 + $0x58] sm:$0xff]
        %v286 = vld [vmem:[%s262 + $0x60] sm:$0xff]
        %v287 = vld [vmem:[%s262 + $0x68] sm:$0xff]
        %v288 = vld [vmem:[%s262 + $0x70] sm:$0xff]
        %v289 = vld [vmem:[%s262 + $0x78] sm:$0xff]
        %v290 = vld [vmem:[%s1] sm:$0xff]
        %v291 = vld [vmem:[%s1 + $0x8] sm:$0xff]
        %v292 = vlaneseq
        %v293 = vshrl.u32 %v292, 7
        %v294 = vsub.s32 0, %v293
        %v295 = vrot.slane %v273, %v294
        %vm296 = vcmask 130048
        %v298 = vsel %vm296, %v274, 0
        %v301 = vsel %vm296, %v275, 0
        %v304 = vsel %vm296, %v276, 0
        %v307 = vsel %vm296, %v277, 0
        %v310 = vsel %vm296, %v278, 0
        %v313 = vsel %vm296, %v279, 0
        %v316 = vsel %vm296, %v280, 0
        %v319 = vsel %vm296, %v281, 0
        %v322 = vsel %vm296, %v282, 0
        %v325 = vsel %vm296, %v283, 0
        %v328 = vsel %vm296, %v284, 0
        %v331 = vsel %vm296, %v285, 0
        %v334 = vsel %vm296, %v286, 0
        %v337 = vsel %vm296, %v287, 0
        %v340 = vsel %vm296, %v288, 0
        %v343 = vsel %vm296, %v289, 0
        %345 = vmatprep.subr.mxu0 0.0
        %346 = vmatpush1.msra.mxu0 %v290
        %347 = vmatprep.subr.mxu0 0.0
        %348 = vmatpush1.msra.mxu0 %v291
        %349 = vmatprep.subr.mxu0 0.0
        %350 = vmatpush1.msra.mxu0 0.0
        %351 = vmatprep.subr.mxu0 0.0
        %352 = vmatpush1.msra.mxu0 0.0
        %353 = vmatprep.subr.mxu0 0.0
        %354 = vmatpush1.msra.mxu0 0.0
        %355 = vmatprep.subr.mxu0 0.0
        %356 = vmatpush1.msra.mxu0 0.0
        %357 = vmatprep.subr.mxu0 0.0
        %358 = vmatpush1.msra.mxu0 0.0
        %359 = vmatprep.subr.mxu0 0.0
        %360 = vmatpush1.msra.mxu0 0.0
        %361 = vmatprep.subr.mxu0 0.0
        %362 = vmatpush1.msra.mxu0 0.0
        %363 = vmatprep.subr.mxu0 0.0
        %364 = vmatpush1.msra.mxu0 0.0
        %365 = vmatprep.subr.mxu0 0.0
        %366 = vmatpush1.msra.mxu0 0.0
        %367 = vmatprep.subr.mxu0 0.0
        %368 = vmatpush1.msra.mxu0 0.0
        %369 = vmatprep.subr.mxu0 0.0
        %370 = vmatpush1.msra.mxu0 0.0
        %371 = vmatprep.subr.mxu0 0.0
        %372 = vmatpush1.msra.mxu0 0.0
        %373 = vmatprep.subr.mxu0 0.0
        %374 = vmatpush1.msra.mxu0 0.0
        %375 = vmatprep.subr.mxu0 0.0
        %376 = vmatpush1.msra.mxu0 0.0
        %377 = vmatprep.subr.mxu0 0.0
        %378 = vmatpush1.msra.mxu0 0.0
        %379 = vmatprep.subr.mxu0 0.0
        %380 = vmatpush1.msra.mxu0 0.0
        %381 = vmatprep.subr.mxu0 0.0
        %382 = vmatpush1.msra.mxu0 0.0
        %383 = vmatprep.subr.mxu0 0.0
        %384 = vmatpush1.msra.mxu0 0.0
        %385 = vmatprep.subr.mxu0 0.0
        %386 = vmatpush1.msra.mxu0 0.0
        %387 = vmatprep.subr.mxu0 0.0
        %388 = vmatpush1.msra.mxu0 0.0
        %389 = vmatprep.subr.mxu0 0.0
        %390 = vmatpush1.msra.mxu0 0.0
        %391 = vmatprep.subr.mxu0 0.0
        %392 = vmatpush1.msra.mxu0 0.0
        %393 = vmatprep.subr.mxu0 0.0
        %394 = vmatpush1.msra.mxu0 0.0
        %395 = vmatprep.subr.mxu0 0.0
        %396 = vmatpush1.msra.mxu0 0.0
        %397 = vmatprep.subr.mxu0 0.0
        %398 = vmatpush1.msra.mxu0 0.0
        %399 = vmatprep.subr.mxu0 0.0
        %400 = vmatpush1.msra.mxu0 0.0
        %401 = vmatprep.subr.mxu0 0.0
        %402 = vmatpush1.msra.mxu0 0.0
        %403 = vmatprep.subr.mxu0 0.0
        %404 = vmatpush1.msra.mxu0 0.0
        %405 = vmatprep.subr.mxu0 0.0
        %406 = vmatpush1.msra.mxu0 0.0
        %407 = vmatprep.subr.mxu0 0.0
        %408 = vmatpush1.msra.mxu0 0.0
        %409 = vmatprep.mubr.f32.mxu0 0.0
        %410 = vmatmul.mubr.f32.gmra.mrb[0].mxu0 %v298
        %v411 = vpop.f32.mrb[0].mxu0
        %v412 = vadd.f32 %v295, %v411
        %v413 = vpop.f32.mrb[0].mxu0
        %414 = vmatprep.mubr.f32.mxu0 0.0
        %415 = vmatmul.mubr.f32.gmra.mrb[0].mxu0 %v301
        %v416 = vpop.f32.mrb[0].mxu0
        %v417 = vadd.f32 %v295, %v416
        %v418 = vpop.f32.mrb[0].mxu0
        %419 = vmatprep.mubr.f32.mxu0 0.0
        %420 = vmatmul.mubr.f32.gmra.mrb[0].mxu0 %v304
        %v421 = vpop.f32.mrb[0].mxu0
        %v422 = vadd.f32 %v295, %v421
        %v423 = vpop.f32.mrb[0].mxu0
        %424 = vmatprep.mubr.f32.mxu0 0.0
        %425 = vmatmul.mubr.f32.gmra.mrb[0].mxu0 %v307
        %v426 = vpop.f32.mrb[0].mxu0
        %v427 = vadd.f32 %v295, %v426
        %v428 = vpop.f32.mrb[0].mxu0
        %429 = vmatprep.mubr.f32.mxu0 0.0
        %430 = vmatmul.mubr.f32.gmra.mrb[0].mxu0 %v310
        %v431 = vpop.f32.mrb[0].mxu0
        %v432 = vadd.f32 %v295, %v431
        %v433 = vpop.f32.mrb[0].mxu0
        %434 = vmatprep.mubr.f32.mxu0 0.0
        %435 = vmatmul.mubr.f32.gmra.mrb[0].mxu0 %v313
        %v436 = vpop.f32.mrb[0].mxu0
        %v437 = vadd.f32 %v295, %v436
        %v438 = vpop.f32.mrb[0].mxu0
        %439 = vmatprep.mubr.f32.mxu0 0.0
        %440 = vmatmul.mubr.f32.gmra.mrb[0].mxu0 %v316
        %v441 = vpop.f32.mrb[0].mxu0
        %v442 = vadd.f32 %v295, %v441
        %v443 = vpop.f32.mrb[0].mxu0
        %444 = vmatprep.mubr.f32.mxu0 0.0
        %445 = vmatmul.mubr.f32.gmra.mrb[0].mxu0 %v319
        %v446 = vpop.f32.mrb[0].mxu0
        %v447 = vadd.f32 %v295, %v446
        %v448 = vpop.f32.mrb[0].mxu0
        %449 = vmatprep.mubr.f32.mxu0 0.0
        %450 = vmatmul.mubr.f32.gmra.mrb[0].mxu0 %v322
        %v451 = vpop.f32.mrb[0].mxu0
        %v452 = vadd.f32 %v295, %v451
        %v453 = vpop.f32.mrb[0].mxu0
        %454 = vmatprep.mubr.f32.mxu0 0.0
        %455 = vmatmul.mubr.f32.gmra.mrb[0].mxu0 %v325
        %v456 = vpop.f32.mrb[0].mxu0
        %v457 = vadd.f32 %v295, %v456
        %v458 = vpop.f32.mrb[0].mxu0
        %459 = vmatprep.mubr.f32.mxu0 0.0
        %460 = vmatmul.mubr.f32.gmra.mrb[0].mxu0 %v328
        %v461 = vpop.f32.mrb[0].mxu0
        %v462 = vadd.f32 %v295, %v461
        %v463 = vpop.f32.mrb[0].mxu0
        %464 = vmatprep.mubr.f32.mxu0 0.0
        %465 = vmatmul.mubr.f32.gmra.mrb[0].mxu0 %v331
        %v466 = vpop.f32.mrb[0].mxu0
        %v467 = vadd.f32 %v295, %v466
        %v468 = vpop.f32.mrb[0].mxu0
        %469 = vmatprep.mubr.f32.mxu0 0.0
        %470 = vmatmul.mubr.f32.gmra.mrb[0].mxu0 %v334
        %v471 = vpop.f32.mrb[0].mxu0
        %v472 = vadd.f32 %v295, %v471
        %v473 = vpop.f32.mrb[0].mxu0
        %474 = vmatprep.mubr.f32.mxu0 0.0
        %475 = vmatmul.mubr.f32.gmra.mrb[0].mxu0 %v337
        %v476 = vpop.f32.mrb[0].mxu0
        %v477 = vadd.f32 %v295, %v476
        %v478 = vpop.f32.mrb[0].mxu0
        %479 = vmatprep.mubr.f32.mxu0 0.0
        %480 = vmatmul.mubr.f32.gmra.mrb[0].mxu0 %v340
        %v481 = vpop.f32.mrb[0].mxu0
        %v482 = vadd.f32 %v295, %v481
        %v483 = vpop.f32.mrb[0].mxu0
        %484 = vmatprep.mubr.f32.mxu0 0.0
        %485 = vmatmul.mubr.f32.gmra.mrb[0].mxu0 %v343
        %v486 = vpop.f32.mrb[0].mxu0
        %v487 = vadd.f32 %v295, %v486
        %v488 = vpop.f32.mrb[0].mxu0
        %489 = vdwg.mxu0
        %vm490 = vcmp.gt.f32.partialorder %v412, 0.0
        %vm491 = vcmp.gt.f32.partialorder %v417, 0.0
        %vm492 = vcmp.gt.f32.partialorder %v422, 0.0
        %vm493 = vcmp.gt.f32.partialorder %v427, 0.0
        %vm494 = vcmp.gt.f32.partialorder %v432, 0.0
        %vm495 = vcmp.gt.f32.partialorder %v437, 0.0
        %vm496 = vcmp.gt.f32.partialorder %v442, 0.0
        %vm497 = vcmp.gt.f32.partialorder %v447, 0.0
        %vm498 = vcmp.gt.f32.partialorder %v452, 0.0
        %vm499 = vcmp.gt.f32.partialorder %v457, 0.0
        %vm500 = vcmp.gt.f32.partialorder %v462, 0.0
        %vm501 = vcmp.gt.f32.partialorder %v467, 0.0
        %vm502 = vcmp.gt.f32.partialorder %v472, 0.0
        %vm503 = vcmp.gt.f32.partialorder %v477, 0.0
        %vm504 = vcmp.gt.f32.partialorder %v482, 0.0
        %vm505 = vcmp.gt.f32.partialorder %v487, 0.0
        %v506 = vmul.f32 %v412, 0.01
        %v507 = vmul.f32 %v417, 0.01
        %v508 = vmul.f32 %v422, 0.01
        %v509 = vmul.f32 %v427, 0.01
        %v510 = vmul.f32 %v432, 0.01
        %v511 = vmul.f32 %v437, 0.01
        %v512 = vmul.f32 %v442, 0.01
        %v513 = vmul.f32 %v447, 0.01
        %v514 = vmul.f32 %v452, 0.01
        %v515 = vmul.f32 %v457, 0.01
        %v516 = vmul.f32 %v462, 0.01
        %v517 = vmul.f32 %v467, 0.01
        %v518 = vmul.f32 %v472, 0.01
        %v519 = vmul.f32 %v477, 0.01
        %v520 = vmul.f32 %v482, 0.01
        %v521 = vmul.f32 %v487, 0.01
        %v522 = vsel %vm490, %v412, %v506
        %v523 = vsel %vm491, %v417, %v507
        %v524 = vsel %vm492, %v422, %v508
        %v525 = vsel %vm493, %v427, %v509
        %v526 = vsel %vm494, %v432, %v510
        %v527 = vsel %vm495, %v437, %v511
        %v528 = vsel %vm496, %v442, %v512
        %v529 = vsel %vm497, %v447, %v513
        %v530 = vsel %vm498, %v452, %v514
        %v531 = vsel %vm499, %v457, %v515
        %v532 = vsel %vm500, %v462, %v516
        %v533 = vsel %vm501, %v467, %v517
        %v534 = vsel %vm502, %v472, %v518
        %v535 = vsel %vm503, %v477, %v519
        %v536 = vsel %vm504, %v482, %v520
        %v537 = vsel %vm505, %v487, %v521
        %v538 = vld [vmem:[%s2] sm:$0xff]
        %v539 = vld [vmem:[%s2 + $0x8] sm:$0xff]
        %v540 = vld [vmem:[%s2 + $0x10] sm:$0xff]
        %v541 = vld [vmem:[%s2 + $0x18] sm:$0xff]
        %v542 = vld [vmem:[%s2 + $0x20] sm:$0xff]
        %v543 = vld [vmem:[%s2 + $0x28] sm:$0xff]
        %v544 = vld [vmem:[%s2 + $0x30] sm:$0xff]
        %v545 = vld [vmem:[%s2 + $0x38] sm:$0xff]
        %v546 = vld [vmem:[%s2 + $0x40] sm:$0xff]
        %v547 = vld [vmem:[%s2 + $0x48] sm:$0xff]
        %v548 = vld [vmem:[%s2 + $0x50] sm:$0xff]
        %v549 = vld [vmem:[%s2 + $0x58] sm:$0xff]
        %v550 = vld [vmem:[%s2 + $0x60] sm:$0xff]
        %v551 = vld [vmem:[%s2 + $0x68] sm:$0xff]
        %v552 = vld [vmem:[%s2 + $0x70] sm:$0xff]
        %v553 = vld [vmem:[%s2 + $0x78] sm:$0xff]
        %v554 = vlaneseq
        %v555 = vshrl.u32 %v554, 7
        %v556 = vsub.s32 1, %v555
        %v557 = vrot.slane %v273, %v556
        %558 = vmatprep.subr.mxu0 0.0
        %559 = vmatpush1.msra.mxu0 %v538
        %560 = vmatprep.subr.mxu0 0.0
        %561 = vmatpush1.msra.mxu0 %v539
        %562 = vmatprep.subr.mxu0 0.0
        %563 = vmatpush1.msra.mxu0 %v540
        %564 = vmatprep.subr.mxu0 0.0
        %565 = vmatpush1.msra.mxu0 %v541
        %566 = vmatprep.subr.mxu0 0.0
        %567 = vmatpush1.msra.mxu0 %v542
        %568 = vmatprep.subr.mxu0 0.0
        %569 = vmatpush1.msra.mxu0 %v543
        %570 = vmatprep.subr.mxu0 0.0
        %571 = vmatpush1.msra.mxu0 %v544
        %572 = vmatprep.subr.mxu0 0.0
        %573 = vmatpush1.msra.mxu0 %v545
        %574 = vmatprep.subr.mxu0 0.0
        %575 = vmatpush1.msra.mxu0 %v546
        %576 = vmatprep.subr.mxu0 0.0
        %577 = vmatpush1.msra.mxu0 %v547
        %578 = vmatprep.subr.mxu0 0.0
        %579 = vmatpush1.msra.mxu0 %v548
        %580 = vmatprep.subr.mxu0 0.0
        %581 = vmatpush1.msra.mxu0 %v549
        %582 = vmatprep.subr.mxu0 0.0
        %583 = vmatpush1.msra.mxu0 %v550
        %584 = vmatprep.subr.mxu0 0.0
        %585 = vmatpush1.msra.mxu0 %v551
        %586 = vmatprep.subr.mxu0 0.0
        %587 = vmatpush1.msra.mxu0 %v552
        %588 = vmatprep.subr.mxu0 0.0
        %589 = vmatpush1.msra.mxu0 %v553
        %590 = vmatprep.subr.mxu0 0.0
        %591 = vmatpush1.msra.mxu0 0.0
        %592 = vmatprep.subr.mxu0 0.0
        %593 = vmatpush1.msra.mxu0 0.0
        %594 = vmatprep.subr.mxu0 0.0
        %595 = vmatpush1.msra.mxu0 0.0
        %596 = vmatprep.subr.mxu0 0.0
        %597 = vmatpush1.msra.mxu0 0.0
        %598 = vmatprep.subr.mxu0 0.0
        %599 = vmatpush1.msra.mxu0 0.0
        %600 = vmatprep.subr.mxu0 0.0
        %601 = vmatpush1.msra.mxu0 0.0
        %602 = vmatprep.subr.mxu0 0.0
        %603 = vmatpush1.msra.mxu0 0.0
        %604 = vmatprep.subr.mxu0 0.0
        %605 = vmatpush1.msra.mxu0 0.0
        %606 = vmatprep.subr.mxu0 0.0
        %607 = vmatpush1.msra.mxu0 0.0
        %608 = vmatprep.subr.mxu0 0.0
        %609 = vmatpush1.msra.mxu0 0.0
        %610 = vmatprep.subr.mxu0 0.0
        %611 = vmatpush1.msra.mxu0 0.0
        %612 = vmatprep.subr.mxu0 0.0
        %613 = vmatpush1.msra.mxu0 0.0
        %614 = vmatprep.subr.mxu0 0.0
        %615 = vmatpush1.msra.mxu0 0.0
        %616 = vmatprep.subr.mxu0 0.0
        %617 = vmatpush1.msra.mxu0 0.0
        %618 = vmatprep.subr.mxu0 0.0
        %619 = vmatpush1.msra.mxu0 0.0
        %620 = vmatprep.subr.mxu0 0.0
        %621 = vmatpush1.msra.mxu0 0.0
        %622 = vmatprep.mubr.f32.mxu0 0.0
        %623 = vmatmul.mubr.f32.gmra.mrb[0].mxu0 %v522
        %v624 = vpop.f32.mrb[0].mxu0
        %v625 = vadd.f32 %v557, %v624
        %v626 = vpop.f32.mrb[0].mxu0
        %627 = vmatprep.mubr.f32.mxu0 0.0
        %628 = vmatmul.mubr.f32.gmra.mrb[0].mxu0 %v523
        %v629 = vpop.f32.mrb[0].mxu0
        %v630 = vadd.f32 %v557, %v629
        %v631 = vpop.f32.mrb[0].mxu0
        %632 = vmatprep.mubr.f32.mxu0 0.0
        %633 = vmatmul.mubr.f32.gmra.mrb[0].mxu0 %v524
        %v634 = vpop.f32.mrb[0].mxu0
        %v635 = vadd.f32 %v557, %v634
        %v636 = vpop.f32.mrb[0].mxu0
        %637 = vmatprep.mubr.f32.mxu0 0.0
        %638 = vmatmul.mubr.f32.gmra.mrb[0].mxu0 %v525
        %v639 = vpop.f32.mrb[0].mxu0
        %v640 = vadd.f32 %v557, %v639
        %v641 = vpop.f32.mrb[0].mxu0
        %642 = vmatprep.mubr.f32.mxu0 0.0
        %643 = vmatmul.mubr.f32.gmra.mrb[0].mxu0 %v526
        %v644 = vpop.f32.mrb[0].mxu0
        %v645 = vadd.f32 %v557, %v644
        %v646 = vpop.f32.mrb[0].mxu0
        %647 = vmatprep.mubr.f32.mxu0 0.0
        %648 = vmatmul.mubr.f32.gmra.mrb[0].mxu0 %v527
        %v649 = vpop.f32.mrb[0].mxu0
        %v650 = vadd.f32 %v557, %v649
        %v651 = vpop.f32.mrb[0].mxu0
        %652 = vmatprep.mubr.f32.mxu0 0.0
        %653 = vmatmul.mubr.f32.gmra.mrb[0].mxu0 %v528
        %v654 = vpop.f32.mrb[0].mxu0
        %v655 = vadd.f32 %v557, %v654
        %v656 = vpop.f32.mrb[0].mxu0
        %657 = vmatprep.mubr.f32.mxu0 0.0
        %658 = vmatmul.mubr.f32.gmra.mrb[0].mxu0 %v529
        %v659 = vpop.f32.mrb[0].mxu0
        %v660 = vadd.f32 %v557, %v659
        %v661 = vpop.f32.mrb[0].mxu0
        %662 = vmatprep.mubr.f32.mxu0 0.0
        %663 = vmatmul.mubr.f32.gmra.mrb[0].mxu0 %v530
        %v664 = vpop.f32.mrb[0].mxu0
        %v665 = vadd.f32 %v557, %v664
        %v666 = vpop.f32.mrb[0].mxu0
        %667 = vmatprep.mubr.f32.mxu0 0.0
        %668 = vmatmul.mubr.f32.gmra.mrb[0].mxu0 %v531
        %v669 = vpop.f32.mrb[0].mxu0
        %v670 = vadd.f32 %v557, %v669
        %v671 = vpop.f32.mrb[0].mxu0
        %672 = vmatprep.mubr.f32.mxu0 0.0
        %673 = vmatmul.mubr.f32.gmra.mrb[0].mxu0 %v532
        %v674 = vpop.f32.mrb[0].mxu0
        %v675 = vadd.f32 %v557, %v674
        %v676 = vpop.f32.mrb[0].mxu0
        %677 = vmatprep.mubr.f32.mxu0 0.0
        %678 = vmatmul.mubr.f32.gmra.mrb[0].mxu0 %v533
        %v679 = vpop.f32.mrb[0].mxu0
        %v680 = vadd.f32 %v557, %v679
        %v681 = vpop.f32.mrb[0].mxu0
        %682 = vmatprep.mubr.f32.mxu0 0.0
        %683 = vmatmul.mubr.f32.gmra.mrb[0].mxu0 %v534
        %v684 = vpop.f32.mrb[0].mxu0
        %v685 = vadd.f32 %v557, %v684
        %v686 = vpop.f32.mrb[0].mxu0
        %687 = vmatprep.mubr.f32.mxu0 0.0
        %688 = vmatmul.mubr.f32.gmra.mrb[0].mxu0 %v535
        %v689 = vpop.f32.mrb[0].mxu0
        %v690 = vadd.f32 %v557, %v689
        %v691 = vpop.f32.mrb[0].mxu0
        %692 = vmatprep.mubr.f32.mxu0 0.0
        %693 = vmatmul.mubr.f32.gmra.mrb[0].mxu0 %v536
        %v694 = vpop.f32.mrb[0].mxu0
        %v695 = vadd.f32 %v557, %v694
        %v696 = vpop.f32.mrb[0].mxu0
        %697 = vmatprep.mubr.f32.mxu0 0.0
        %698 = vmatmul.mubr.f32.gmra.mrb[0].mxu0 %v537
        %v699 = vpop.f32.mrb[0].mxu0
        %v700 = vadd.f32 %v557, %v699
        %v701 = vpop.f32.mrb[0].mxu0
        %702 = vdwg.mxu0
        %vm703 = vcmp.gt.f32.partialorder %v625, 0.0
        %vm704 = vcmp.gt.f32.partialorder %v630, 0.0
        %vm705 = vcmp.gt.f32.partialorder %v635, 0.0
        %vm706 = vcmp.gt.f32.partialorder %v640, 0.0
        %vm707 = vcmp.gt.f32.partialorder %v645, 0.0
        %vm708 = vcmp.gt.f32.partialorder %v650, 0.0
        %vm709 = vcmp.gt.f32.partialorder %v655, 0.0
        %vm710 = vcmp.gt.f32.partialorder %v660, 0.0
        %vm711 = vcmp.gt.f32.partialorder %v665, 0.0
        %vm712 = vcmp.gt.f32.partialorder %v670, 0.0
        %vm713 = vcmp.gt.f32.partialorder %v675, 0.0
        %vm714 = vcmp.gt.f32.partialorder %v680, 0.0
        %vm715 = vcmp.gt.f32.partialorder %v685, 0.0
        %vm716 = vcmp.gt.f32.partialorder %v690, 0.0
        %vm717 = vcmp.gt.f32.partialorder %v695, 0.0
        %vm718 = vcmp.gt.f32.partialorder %v700, 0.0
        %v719 = vmul.f32 %v625, 0.01
        %v720 = vmul.f32 %v630, 0.01
        %v721 = vmul.f32 %v635, 0.01
        %v722 = vmul.f32 %v640, 0.01
        %v723 = vmul.f32 %v645, 0.01
        %v724 = vmul.f32 %v650, 0.01
        %v725 = vmul.f32 %v655, 0.01
        %v726 = vmul.f32 %v660, 0.01
        %v727 = vmul.f32 %v665, 0.01
        %v728 = vmul.f32 %v670, 0.01
        %v729 = vmul.f32 %v675, 0.01
        %v730 = vmul.f32 %v680, 0.01
        %v731 = vmul.f32 %v685, 0.01
        %v732 = vmul.f32 %v690, 0.01
        %v733 = vmul.f32 %v695, 0.01
        %v734 = vmul.f32 %v700, 0.01
        %v735 = vsel %vm703, %v625, %v719
        %v736 = vsel %vm704, %v630, %v720
        %v737 = vsel %vm705, %v635, %v721
        %v738 = vsel %vm706, %v640, %v722
        %v739 = vsel %vm707, %v645, %v723
        %v740 = vsel %vm708, %v650, %v724
        %v741 = vsel %vm709, %v655, %v725
        %v742 = vsel %vm710, %v660, %v726
        %v743 = vsel %vm711, %v665, %v727
        %v744 = vsel %vm712, %v670, %v728
        %v745 = vsel %vm713, %v675, %v729
        %v746 = vsel %vm714, %v680, %v730
        %v747 = vsel %vm715, %v685, %v731
        %v748 = vsel %vm716, %v690, %v732
        %v749 = vsel %vm717, %v695, %v733
        %v750 = vsel %vm718, %v700, %v734
        %s751 = scalar_lea.vmem %s2, 128
        %v752 = vld [vmem:[%s751] sm:$0xff]
        %v753 = vld [vmem:[%s751 + $0x8] sm:$0xff]
        %v754 = vld [vmem:[%s751 + $0x10] sm:$0xff]
        %v755 = vld [vmem:[%s751 + $0x18] sm:$0xff]
        %v756 = vld [vmem:[%s751 + $0x20] sm:$0xff]
        %v757 = vld [vmem:[%s751 + $0x28] sm:$0xff]
        %v758 = vld [vmem:[%s751 + $0x30] sm:$0xff]
        %v759 = vld [vmem:[%s751 + $0x38] sm:$0xff]
        %v760 = vld [vmem:[%s751 + $0x40] sm:$0xff]
        %v761 = vld [vmem:[%s751 + $0x48] sm:$0xff]
        %v762 = vld [vmem:[%s751 + $0x50] sm:$0xff]
        %v763 = vld [vmem:[%s751 + $0x58] sm:$0xff]
        %v764 = vld [vmem:[%s751 + $0x60] sm:$0xff]
        %v765 = vld [vmem:[%s751 + $0x68] sm:$0xff]
        %v766 = vld [vmem:[%s751 + $0x70] sm:$0xff]
        %v767 = vld [vmem:[%s751 + $0x78] sm:$0xff]
        %v768 = vlaneseq
        %v769 = vshrl.u32 %v768, 7
        %v770 = vsub.s32 2, %v769
        %v771 = vrot.slane %v273, %v770
        %772 = vmatprep.subr.mxu0 0.0
        %773 = vmatpush1.msra.mxu0 %v752
        %774 = vmatprep.subr.mxu0 0.0
        %775 = vmatpush1.msra.mxu0 %v753
        %776 = vmatprep.subr.mxu0 0.0
        %777 = vmatpush1.msra.mxu0 %v754
        %778 = vmatprep.subr.mxu0 0.0
        %779 = vmatpush1.msra.mxu0 %v755
        %780 = vmatprep.subr.mxu0 0.0
        %781 = vmatpush1.msra.mxu0 %v756
        %782 = vmatprep.subr.mxu0 0.0
        %783 = vmatpush1.msra.mxu0 %v757
        %784 = vmatprep.subr.mxu0 0.0
        %785 = vmatpush1.msra.mxu0 %v758
        %786 = vmatprep.subr.mxu0 0.0
        %787 = vmatpush1.msra.mxu0 %v759
        %788 = vmatprep.subr.mxu0 0.0
        %789 = vmatpush1.msra.mxu0 %v760
        %790 = vmatprep.subr.mxu0 0.0
        %791 = vmatpush1.msra.mxu0 %v761
        %792 = vmatprep.subr.mxu0 0.0
        %793 = vmatpush1.msra.mxu0 %v762
        %794 = vmatprep.subr.mxu0 0.0
        %795 = vmatpush1.msra.mxu0 %v763
        %796 = vmatprep.subr.mxu0 0.0
        %797 = vmatpush1.msra.mxu0 %v764
        %798 = vmatprep.subr.mxu0 0.0
        %799 = vmatpush1.msra.mxu0 %v765
        %800 = vmatprep.subr.mxu0 0.0
        %801 = vmatpush1.msra.mxu0 %v766
        %802 = vmatprep.subr.mxu0 0.0
        %803 = vmatpush1.msra.mxu0 %v767
        %804 = vmatprep.subr.mxu0 0.0
        %805 = vmatpush1.msra.mxu0 0.0
        %806 = vmatprep.subr.mxu0 0.0
        %807 = vmatpush1.msra.mxu0 0.0
        %808 = vmatprep.subr.mxu0 0.0
        %809 = vmatpush1.msra.mxu0 0.0
        %810 = vmatprep.subr.mxu0 0.0
        %811 = vmatpush1.msra.mxu0 0.0
        %812 = vmatprep.subr.mxu0 0.0
        %813 = vmatpush1.msra.mxu0 0.0
        %814 = vmatprep.subr.mxu0 0.0
        %815 = vmatpush1.msra.mxu0 0.0
        %816 = vmatprep.subr.mxu0 0.0
        %817 = vmatpush1.msra.mxu0 0.0
        %818 = vmatprep.subr.mxu0 0.0
        %819 = vmatpush1.msra.mxu0 0.0
        %820 = vmatprep.subr.mxu0 0.0
        %821 = vmatpush1.msra.mxu0 0.0
        %822 = vmatprep.subr.mxu0 0.0
        %823 = vmatpush1.msra.mxu0 0.0
        %824 = vmatprep.subr.mxu0 0.0
        %825 = vmatpush1.msra.mxu0 0.0
        %826 = vmatprep.subr.mxu0 0.0
        %827 = vmatpush1.msra.mxu0 0.0
        %828 = vmatprep.subr.mxu0 0.0
        %829 = vmatpush1.msra.mxu0 0.0
        %830 = vmatprep.subr.mxu0 0.0
        %831 = vmatpush1.msra.mxu0 0.0
        %832 = vmatprep.subr.mxu0 0.0
        %833 = vmatpush1.msra.mxu0 0.0
        %834 = vmatprep.subr.mxu0 0.0
        %835 = vmatpush1.msra.mxu0 0.0
        %836 = vmatprep.mubr.f32.mxu0 0.0
        %837 = vmatmul.mubr.f32.gmra.mrb[0].mxu0 %v735
        %v838 = vpop.f32.mrb[0].mxu0
        %v839 = vadd.f32 %v771, %v838
        %v840 = vpop.f32.mrb[0].mxu0
        %841 = vmatprep.mubr.f32.mxu0 0.0
        %842 = vmatmul.mubr.f32.gmra.mrb[0].mxu0 %v736
        %v843 = vpop.f32.mrb[0].mxu0
        %v844 = vadd.f32 %v771, %v843
        %v845 = vpop.f32.mrb[0].mxu0
        %846 = vmatprep.mubr.f32.mxu0 0.0
        %847 = vmatmul.mubr.f32.gmra.mrb[0].mxu0 %v737
        %v848 = vpop.f32.mrb[0].mxu0
        %v849 = vadd.f32 %v771, %v848
        %v850 = vpop.f32.mrb[0].mxu0
        %851 = vmatprep.mubr.f32.mxu0 0.0
        %852 = vmatmul.mubr.f32.gmra.mrb[0].mxu0 %v738
        %v853 = vpop.f32.mrb[0].mxu0
        %v854 = vadd.f32 %v771, %v853
        %v855 = vpop.f32.mrb[0].mxu0
        %856 = vmatprep.mubr.f32.mxu0 0.0
        %857 = vmatmul.mubr.f32.gmra.mrb[0].mxu0 %v739
        %v858 = vpop.f32.mrb[0].mxu0
        %v859 = vadd.f32 %v771, %v858
        %v860 = vpop.f32.mrb[0].mxu0
        %861 = vmatprep.mubr.f32.mxu0 0.0
        %862 = vmatmul.mubr.f32.gmra.mrb[0].mxu0 %v740
        %v863 = vpop.f32.mrb[0].mxu0
        %v864 = vadd.f32 %v771, %v863
        %v865 = vpop.f32.mrb[0].mxu0
        %866 = vmatprep.mubr.f32.mxu0 0.0
        %867 = vmatmul.mubr.f32.gmra.mrb[0].mxu0 %v741
        %v868 = vpop.f32.mrb[0].mxu0
        %v869 = vadd.f32 %v771, %v868
        %v870 = vpop.f32.mrb[0].mxu0
        %871 = vmatprep.mubr.f32.mxu0 0.0
        %872 = vmatmul.mubr.f32.gmra.mrb[0].mxu0 %v742
        %v873 = vpop.f32.mrb[0].mxu0
        %v874 = vadd.f32 %v771, %v873
        %v875 = vpop.f32.mrb[0].mxu0
        %876 = vmatprep.mubr.f32.mxu0 0.0
        %877 = vmatmul.mubr.f32.gmra.mrb[0].mxu0 %v743
        %v878 = vpop.f32.mrb[0].mxu0
        %v879 = vadd.f32 %v771, %v878
        %v880 = vpop.f32.mrb[0].mxu0
        %881 = vmatprep.mubr.f32.mxu0 0.0
        %882 = vmatmul.mubr.f32.gmra.mrb[0].mxu0 %v744
        %v883 = vpop.f32.mrb[0].mxu0
        %v884 = vadd.f32 %v771, %v883
        %v885 = vpop.f32.mrb[0].mxu0
        %886 = vmatprep.mubr.f32.mxu0 0.0
        %887 = vmatmul.mubr.f32.gmra.mrb[0].mxu0 %v745
        %v888 = vpop.f32.mrb[0].mxu0
        %v889 = vadd.f32 %v771, %v888
        %v890 = vpop.f32.mrb[0].mxu0
        %891 = vmatprep.mubr.f32.mxu0 0.0
        %892 = vmatmul.mubr.f32.gmra.mrb[0].mxu0 %v746
        %v893 = vpop.f32.mrb[0].mxu0
        %v894 = vadd.f32 %v771, %v893
        %v895 = vpop.f32.mrb[0].mxu0
        %896 = vmatprep.mubr.f32.mxu0 0.0
        %897 = vmatmul.mubr.f32.gmra.mrb[0].mxu0 %v747
        %v898 = vpop.f32.mrb[0].mxu0
        %v899 = vadd.f32 %v771, %v898
        %v900 = vpop.f32.mrb[0].mxu0
        %901 = vmatprep.mubr.f32.mxu0 0.0
        %902 = vmatmul.mubr.f32.gmra.mrb[0].mxu0 %v748
        %v903 = vpop.f32.mrb[0].mxu0
        %v904 = vadd.f32 %v771, %v903
        %v905 = vpop.f32.mrb[0].mxu0
        %906 = vmatprep.mubr.f32.mxu0 0.0
        %907 = vmatmul.mubr.f32.gmra.mrb[0].mxu0 %v749
        %v908 = vpop.f32.mrb[0].mxu0
        %v909 = vadd.f32 %v771, %v908
        %v910 = vpop.f32.mrb[0].mxu0
        %911 = vmatprep.mubr.f32.mxu0 0.0
        %912 = vmatmul.mubr.f32.gmra.mrb[0].mxu0 %v750
        %v913 = vpop.f32.mrb[0].mxu0
        %v914 = vadd.f32 %v771, %v913
        %v915 = vpop.f32.mrb[0].mxu0
        %916 = vdwg.mxu0
        %vm917 = vcmp.gt.f32.partialorder %v839, 0.0
        %vm918 = vcmp.gt.f32.partialorder %v844, 0.0
        %vm919 = vcmp.gt.f32.partialorder %v849, 0.0
        %vm920 = vcmp.gt.f32.partialorder %v854, 0.0
        %vm921 = vcmp.gt.f32.partialorder %v859, 0.0
        %vm922 = vcmp.gt.f32.partialorder %v864, 0.0
        %vm923 = vcmp.gt.f32.partialorder %v869, 0.0
        %vm924 = vcmp.gt.f32.partialorder %v874, 0.0
        %vm925 = vcmp.gt.f32.partialorder %v879, 0.0
        %vm926 = vcmp.gt.f32.partialorder %v884, 0.0
        %vm927 = vcmp.gt.f32.partialorder %v889, 0.0
        %vm928 = vcmp.gt.f32.partialorder %v894, 0.0
        %vm929 = vcmp.gt.f32.partialorder %v899, 0.0
        %vm930 = vcmp.gt.f32.partialorder %v904, 0.0
        %vm931 = vcmp.gt.f32.partialorder %v909, 0.0
        %vm932 = vcmp.gt.f32.partialorder %v914, 0.0
        %v933 = vmul.f32 %v839, 0.01
        %v934 = vmul.f32 %v844, 0.01
        %v935 = vmul.f32 %v849, 0.01
        %v936 = vmul.f32 %v854, 0.01
        %v937 = vmul.f32 %v859, 0.01
        %v938 = vmul.f32 %v864, 0.01
        %v939 = vmul.f32 %v869, 0.01
        %v940 = vmul.f32 %v874, 0.01
        %v941 = vmul.f32 %v879, 0.01
        %v942 = vmul.f32 %v884, 0.01
        %v943 = vmul.f32 %v889, 0.01
        %v944 = vmul.f32 %v894, 0.01
        %v945 = vmul.f32 %v899, 0.01
        %v946 = vmul.f32 %v904, 0.01
        %v947 = vmul.f32 %v909, 0.01
        %v948 = vmul.f32 %v914, 0.01
        %v949 = vsel %vm917, %v839, %v933
        %v950 = vsel %vm918, %v844, %v934
        %v951 = vsel %vm919, %v849, %v935
        %v952 = vsel %vm920, %v854, %v936
        %v953 = vsel %vm921, %v859, %v937
        %v954 = vsel %vm922, %v864, %v938
        %v955 = vsel %vm923, %v869, %v939
        %v956 = vsel %vm924, %v874, %v940
        %v957 = vsel %vm925, %v879, %v941
        %v958 = vsel %vm926, %v884, %v942
        %v959 = vsel %vm927, %v889, %v943
        %v960 = vsel %vm928, %v894, %v944
        %v961 = vsel %vm929, %v899, %v945
        %v962 = vsel %vm930, %v904, %v946
        %v963 = vsel %vm931, %v909, %v947
        %v964 = vsel %vm932, %v914, %v948
        %v965 = vld [vmem:[%s3] sm:$0xff]
        %v966 = vld [vmem:[%s3 + $0x8] sm:$0xff]
        %v967 = vld [vmem:[%s3 + $0x10] sm:$0xff]
        %v968 = vld [vmem:[%s3 + $0x18] sm:$0xff]
        %v969 = vld [vmem:[%s3 + $0x20] sm:$0xff]
        %v970 = vld [vmem:[%s3 + $0x28] sm:$0xff]
        %v971 = vld [vmem:[%s3 + $0x30] sm:$0xff]
        %v972 = vld [vmem:[%s3 + $0x38] sm:$0xff]
        %v973 = vld [vmem:[%s3 + $0x40] sm:$0xff]
        %v974 = vld [vmem:[%s3 + $0x48] sm:$0xff]
        %v975 = vld [vmem:[%s3 + $0x50] sm:$0xff]
        %v976 = vld [vmem:[%s3 + $0x58] sm:$0xff]
        %v977 = vld [vmem:[%s3 + $0x60] sm:$0xff]
        %v978 = vld [vmem:[%s3 + $0x68] sm:$0xff]
        %v979 = vld [vmem:[%s3 + $0x70] sm:$0xff]
        %v980 = vld [vmem:[%s3 + $0x78] sm:$0xff]
        %v981 = vld [vmem:[%s5] sm:$0x1]
        %v983 = vlaneseq
        %v984 = vshrl.u32 %v983, 7
        %v985 = vsub.s32 0, %v984
        %v986 = vrot.slane %v981, %v985
        %988 = vmatprep.subr.mxu0 0.0
        %989 = vmatpush1.msra.mxu0 %v965
        %990 = vmatprep.subr.mxu0 0.0
        %991 = vmatpush1.msra.mxu0 %v966
        %992 = vmatprep.subr.mxu0 0.0
        %993 = vmatpush1.msra.mxu0 %v967
        %994 = vmatprep.subr.mxu0 0.0
        %995 = vmatpush1.msra.mxu0 %v968
        %996 = vmatprep.subr.mxu0 0.0
        %997 = vmatpush1.msra.mxu0 %v969
        %998 = vmatprep.subr.mxu0 0.0
        %999 = vmatpush1.msra.mxu0 %v970
        %1000 = vmatprep.subr.mxu0 0.0
        %1001 = vmatpush1.msra.mxu0 %v971
        %1002 = vmatprep.subr.mxu0 0.0
        %1003 = vmatpush1.msra.mxu0 %v972
        %1004 = vmatprep.subr.mxu0 0.0
        %1005 = vmatpush1.msra.mxu0 %v973
        %1006 = vmatprep.subr.mxu0 0.0
        %1007 = vmatpush1.msra.mxu0 %v974
        %1008 = vmatprep.subr.mxu0 0.0
        %1009 = vmatpush1.msra.mxu0 %v975
        %1010 = vmatprep.subr.mxu0 0.0
        %1011 = vmatpush1.msra.mxu0 %v976
        %1012 = vmatprep.subr.mxu0 0.0
        %1013 = vmatpush1.msra.mxu0 %v977
        %1014 = vmatprep.subr.mxu0 0.0
        %1015 = vmatpush1.msra.mxu0 %v978
        %1016 = vmatprep.subr.mxu0 0.0
        %1017 = vmatpush1.msra.mxu0 %v979
        %1018 = vmatprep.subr.mxu0 0.0
        %1019 = vmatpush1.msra.mxu0 %v980
        %1020 = vmatprep.subr.mxu0 0.0
        %1021 = vmatpush1.msra.mxu0 0.0
        %1022 = vmatprep.subr.mxu0 0.0
        %1023 = vmatpush1.msra.mxu0 0.0
        %1024 = vmatprep.subr.mxu0 0.0
        %1025 = vmatpush1.msra.mxu0 0.0
        %1026 = vmatprep.subr.mxu0 0.0
        %1027 = vmatpush1.msra.mxu0 0.0
        %1028 = vmatprep.subr.mxu0 0.0
        %1029 = vmatpush1.msra.mxu0 0.0
        %1030 = vmatprep.subr.mxu0 0.0
        %1031 = vmatpush1.msra.mxu0 0.0
        %1032 = vmatprep.subr.mxu0 0.0
        %1033 = vmatpush1.msra.mxu0 0.0
        %1034 = vmatprep.subr.mxu0 0.0
        %1035 = vmatpush1.msra.mxu0 0.0
        %1036 = vmatprep.subr.mxu0 0.0
        %1037 = vmatpush1.msra.mxu0 0.0
        %1038 = vmatprep.subr.mxu0 0.0
        %1039 = vmatpush1.msra.mxu0 0.0
        %1040 = vmatprep.subr.mxu0 0.0
        %1041 = vmatpush1.msra.mxu0 0.0
        %1042 = vmatprep.subr.mxu0 0.0
        %1043 = vmatpush1.msra.mxu0 0.0
        %1044 = vmatprep.subr.mxu0 0.0
        %1045 = vmatpush1.msra.mxu0 0.0
        %1046 = vmatprep.subr.mxu0 0.0
        %1047 = vmatpush1.msra.mxu0 0.0
        %1048 = vmatprep.subr.mxu0 0.0
        %1049 = vmatpush1.msra.mxu0 0.0
        %1050 = vmatprep.subr.mxu0 0.0
        %1051 = vmatpush1.msra.mxu0 0.0
        %1052 = vmatprep.mubr.f32.mxu0 0.0
        %1053 = vmatmul.mubr.f32.gmra.mrb[0].mxu0 %v949
        %v1054 = vpop.f32.mrb[0].mxu0
        %v1055 = vadd.f32 %v986, %v1054
        %v1056 = vpop.f32.mrb[0].mxu0
        %1057 = vmatprep.mubr.f32.mxu0 0.0
        %1058 = vmatmul.mubr.f32.gmra.mrb[0].mxu0 %v950
        %v1059 = vpop.f32.mrb[0].mxu0
        %v1060 = vadd.f32 %v986, %v1059
        %v1061 = vpop.f32.mrb[0].mxu0
        %1062 = vmatprep.mubr.f32.mxu0 0.0
        %1063 = vmatmul.mubr.f32.gmra.mrb[0].mxu0 %v951
        %v1064 = vpop.f32.mrb[0].mxu0
        %v1065 = vadd.f32 %v986, %v1064
        %v1066 = vpop.f32.mrb[0].mxu0
        %1067 = vmatprep.mubr.f32.mxu0 0.0
        %1068 = vmatmul.mubr.f32.gmra.mrb[0].mxu0 %v952
        %v1069 = vpop.f32.mrb[0].mxu0
        %v1070 = vadd.f32 %v986, %v1069
        %v1071 = vpop.f32.mrb[0].mxu0
        %1072 = vmatprep.mubr.f32.mxu0 0.0
        %1073 = vmatmul.mubr.f32.gmra.mrb[0].mxu0 %v953
        %v1074 = vpop.f32.mrb[0].mxu0
        %v1075 = vadd.f32 %v986, %v1074
        %v1076 = vpop.f32.mrb[0].mxu0
        %1077 = vmatprep.mubr.f32.mxu0 0.0
        %1078 = vmatmul.mubr.f32.gmra.mrb[0].mxu0 %v954
        %v1079 = vpop.f32.mrb[0].mxu0
        %v1080 = vadd.f32 %v986, %v1079
        %v1081 = vpop.f32.mrb[0].mxu0
        %1082 = vmatprep.mubr.f32.mxu0 0.0
        %1083 = vmatmul.mubr.f32.gmra.mrb[0].mxu0 %v955
        %v1084 = vpop.f32.mrb[0].mxu0
        %v1085 = vadd.f32 %v986, %v1084
        %v1086 = vpop.f32.mrb[0].mxu0
        %1087 = vmatprep.mubr.f32.mxu0 0.0
        %1088 = vmatmul.mubr.f32.gmra.mrb[0].mxu0 %v956
        %v1089 = vpop.f32.mrb[0].mxu0
        %v1090 = vadd.f32 %v986, %v1089
        %v1091 = vpop.f32.mrb[0].mxu0
        %1092 = vmatprep.mubr.f32.mxu0 0.0
        %1093 = vmatmul.mubr.f32.gmra.mrb[0].mxu0 %v957
        %v1094 = vpop.f32.mrb[0].mxu0
        %v1095 = vadd.f32 %v986, %v1094
        %v1096 = vpop.f32.mrb[0].mxu0
        %1097 = vmatprep.mubr.f32.mxu0 0.0
        %1098 = vmatmul.mubr.f32.gmra.mrb[0].mxu0 %v958
        %v1099 = vpop.f32.mrb[0].mxu0
        %v1100 = vadd.f32 %v986, %v1099
        %v1101 = vpop.f32.mrb[0].mxu0
        %1102 = vmatprep.mubr.f32.mxu0 0.0
        %1103 = vmatmul.mubr.f32.gmra.mrb[0].mxu0 %v959
        %v1104 = vpop.f32.mrb[0].mxu0
        %v1105 = vadd.f32 %v986, %v1104
        %v1106 = vpop.f32.mrb[0].mxu0
        %1107 = vmatprep.mubr.f32.mxu0 0.0
        %1108 = vmatmul.mubr.f32.gmra.mrb[0].mxu0 %v960
        %v1109 = vpop.f32.mrb[0].mxu0
        %v1110 = vadd.f32 %v986, %v1109
        %v1111 = vpop.f32.mrb[0].mxu0
        %1112 = vmatprep.mubr.f32.mxu0 0.0
        %1113 = vmatmul.mubr.f32.gmra.mrb[0].mxu0 %v961
        %v1114 = vpop.f32.mrb[0].mxu0
        %v1115 = vadd.f32 %v986, %v1114
        %v1116 = vpop.f32.mrb[0].mxu0
        %1117 = vmatprep.mubr.f32.mxu0 0.0
        %1118 = vmatmul.mubr.f32.gmra.mrb[0].mxu0 %v962
        %v1119 = vpop.f32.mrb[0].mxu0
        %v1120 = vadd.f32 %v986, %v1119
        %v1121 = vpop.f32.mrb[0].mxu0
        %1122 = vmatprep.mubr.f32.mxu0 0.0
        %1123 = vmatmul.mubr.f32.gmra.mrb[0].mxu0 %v963
        %v1124 = vpop.f32.mrb[0].mxu0
        %v1125 = vadd.f32 %v986, %v1124
        %v1126 = vpop.f32.mrb[0].mxu0
        %1127 = vmatprep.mubr.f32.mxu0 0.0
        %1128 = vmatmul.mubr.f32.gmra.mrb[0].mxu0 %v964
        %v1129 = vpop.f32.mrb[0].mxu0
        %v1130 = vadd.f32 %v986, %v1129
        %v1131 = vpop.f32.mrb[0].mxu0
        %1132 = vdwg.mxu0
        %vm1133 = vcmask 64512
        %1134 = vst.msk [vmem:[%s253] sm:$0xff] %vm1133, %v1055
        %1135 = vst.msk [vmem:[%s253 + $0x8] sm:$0xff] %vm1133, %v1060
        %1136 = vst.msk [vmem:[%s253 + $0x10] sm:$0xff] %vm1133, %v1065
        %1137 = vst.msk [vmem:[%s253 + $0x18] sm:$0xff] %vm1133, %v1070
        %1138 = vst.msk [vmem:[%s253 + $0x20] sm:$0xff] %vm1133, %v1075
        %1139 = vst.msk [vmem:[%s253 + $0x28] sm:$0xff] %vm1133, %v1080
        %1140 = vst.msk [vmem:[%s253 + $0x30] sm:$0xff] %vm1133, %v1085
        %1141 = vst.msk [vmem:[%s253 + $0x38] sm:$0xff] %vm1133, %v1090
        %1142 = vst.msk [vmem:[%s253 + $0x40] sm:$0xff] %vm1133, %v1095
        %1143 = vst.msk [vmem:[%s253 + $0x48] sm:$0xff] %vm1133, %v1100
        %1144 = vst.msk [vmem:[%s253 + $0x50] sm:$0xff] %vm1133, %v1105
        %1145 = vst.msk [vmem:[%s253 + $0x58] sm:$0xff] %vm1133, %v1110
        %1146 = vst.msk [vmem:[%s253 + $0x60] sm:$0xff] %vm1133, %v1115
        %1147 = vst.msk [vmem:[%s253 + $0x68] sm:$0xff] %vm1133, %v1120
        %1148 = vst.msk [vmem:[%s253 + $0x70] sm:$0xff] %vm1133, %v1125
        %1149 = vst.msk [vmem:[%s253 + $0x78] sm:$0xff] %vm1133, %v1130
        %s1150 = sand.u32 %s156, 1
        %s1151 = sand.u32 %s156, 1
        %s1152 = smul.addr %s1151, 128
        %s1153 = scalar_lea.vmem [#allocation2], %s1152
        // Predicated region
        $region45: #{tpu_custom_call.1} parent=43 // pred_check
          %p1154 = pneg %p166
        $region46: #{tpu_custom_call.1} parent=43 // pred_check_branch
          %1156 = sbr.rel (%p1154) target = $region48
        $region47: #{tpu_custom_call.1} parent=43 // pred_region
          %s1157 = smul.u32 16, %s17
          %s1158 = ssub.s32 38, %s1157
          %p1159 = scmp.lt.s32.totalorder %s1158, 16
          %s1160 = scalar_select %p1159, %s1158, 16
          %s1161 = smul.u32 128, %s1160
          %p1162 = scmp.ne.s32.totalorder 0, %s1161
          %s1163 = smul.addr %s1157, 8
          %s1164 = scalar_lea.vmem %s6, %s1163
          // Predicated region
          $region49: #{tpu_custom_call.1} parent=47 // pred_check
            %p1165 = pneg %p1162
          $region50: #{tpu_custom_call.1} parent=47 // pred_check_branch
            %1167 = sbr.rel (%p1165) target = $region52
          $region51: #{tpu_custom_call.1} parent=47 // pred_region
            // Predicated region
            $region53: #{tpu_custom_call.1} parent=51 // pred_check
              _
            $region54: #{tpu_custom_call.1} parent=51 // pred_check_branch
              %1169 = sbr.rel (0) target = $region56
            $region55: #{tpu_custom_call.1} parent=51 // pred_region
              // Predicated region
              $region75: #{tpu_custom_call.1} parent=55 // pred_check
                _
              $region76: #{tpu_custom_call.1} parent=55 // pred_check_branch
                %1248 = sbr.rel (0) target = $region78
              $region77: #{tpu_custom_call.1} parent=55 // pred_region
                %s1249 = sshrl.u32 %s1160, 4
                // While loop
                $region79: #{tpu_custom_call.1} parent=77 // loop_pre_header
                  _
                $region80: #{tpu_custom_call.1} parent=77 // loop_header
                  %s1251 = sphi 0, %s1253
                  %p1252 = scmp.ge.s32.totalorder %s1251, %s1249
                  %s1256 = sphi 0, %s1293
                  %s1257 = sphi %s1153, %s1296
                  %s1258 = sphi %s1164, %s1297
                $region81: #{tpu_custom_call.1} parent=77 // loop_header_branch
                  %1255 = sbr.rel (%p1252) target = $region85
                $region82: #{tpu_custom_call.1} parent=77 // loop_body
                  %v1259 = vld [vmem:[%s1257] sm:$0xff]
                  %1260 = vst [vmem:[%s1258] sm:$0xff] %v1259
                  %v1261 = vld [vmem:[%s1257 + $0x8] sm:$0xff]
                  %1262 = vst [vmem:[%s1258 + $0x8] sm:$0xff] %v1261
                  %v1263 = vld [vmem:[%s1257 + $0x10] sm:$0xff]
                  %1264 = vst [vmem:[%s1258 + $0x10] sm:$0xff] %v1263
                  %v1265 = vld [vmem:[%s1257 + $0x18] sm:$0xff]
                  %1266 = vst [vmem:[%s1258 + $0x18] sm:$0xff] %v1265
                  %v1267 = vld [vmem:[%s1257 + $0x20] sm:$0xff]
                  %1268 = vst [vmem:[%s1258 + $0x20] sm:$0xff] %v1267
                  %v1269 = vld [vmem:[%s1257 + $0x28] sm:$0xff]
                  %1270 = vst [vmem:[%s1258 + $0x28] sm:$0xff] %v1269
                  %v1271 = vld [vmem:[%s1257 + $0x30] sm:$0xff]
                  %1272 = vst [vmem:[%s1258 + $0x30] sm:$0xff] %v1271
                  %v1273 = vld [vmem:[%s1257 + $0x38] sm:$0xff]
                  %1274 = vst [vmem:[%s1258 + $0x38] sm:$0xff] %v1273
                  %v1275 = vld [vmem:[%s1257 + $0x40] sm:$0xff]
                  %1276 = vst [vmem:[%s1258 + $0x40] sm:$0xff] %v1275
                  %v1277 = vld [vmem:[%s1257 + $0x48] sm:$0xff]
                  %1278 = vst [vmem:[%s1258 + $0x48] sm:$0xff] %v1277
                  %v1279 = vld [vmem:[%s1257 + $0x50] sm:$0xff]
                  %1280 = vst [vmem:[%s1258 + $0x50] sm:$0xff] %v1279
                  %v1281 = vld [vmem:[%s1257 + $0x58] sm:$0xff]
                  %1282 = vst [vmem:[%s1258 + $0x58] sm:$0xff] %v1281
                  %v1283 = vld [vmem:[%s1257 + $0x60] sm:$0xff]
                  %1284 = vst [vmem:[%s1258 + $0x60] sm:$0xff] %v1283
                  %v1285 = vld [vmem:[%s1257 + $0x68] sm:$0xff]
                  %1286 = vst [vmem:[%s1258 + $0x68] sm:$0xff] %v1285
                  %v1287 = vld [vmem:[%s1257 + $0x70] sm:$0xff]
                  %1288 = vst [vmem:[%s1258 + $0x70] sm:$0xff] %v1287
                  %v1289 = vld [vmem:[%s1257 + $0x78] sm:$0xff]
                  %1290 = vst [vmem:[%s1258 + $0x78] sm:$0xff] %v1289
                  %s1291 = sadd.s32 1, %s1256
                  %p1292 = scmp.ge.s32.totalorder %s1291, %s1249
                  %s1293 = scalar_select %p1292, 0, %s1291
                  %s1294 = smul.u32 %s1293, 128
                  %s1295 = smul.u32 %s1293, 128
                  %s1296 = scalar_lea.vmem %s1153, %s1294 [#allocation2]
                  %s1297 = scalar_lea.vmem %s1164, %s1295
                $region83: #{tpu_custom_call.1} parent=77 // loop_footer
                  %s1253 = sadd.s32 %s1251, 1
                $region84: #{tpu_custom_call.1} parent=77 // loop_footer_branch
                  %1250 = sbr.rel target = $region80
                $region85: #{tpu_custom_call.1} parent=77 // loop_exit
                  _
                %s1298 = sshrl.u32 %s1160, 4
                %s1299 = sand.u32 %s1160, 15
                %s1300 = smul.u32 %s1298, 16
                %s1301 = smul.u32 8, %s1300
                %s1302 = scalar_lea.vmem %s1153, %s1301 [#allocation2]
                %s1303 = smul.u32 8, %s1300
                %s1304 = scalar_lea.vmem %s1164, %s1303
                // While loop
                $region86: #{tpu_custom_call.1} parent=77 // loop_pre_header
                  _
                $region87: #{tpu_custom_call.1} parent=77 // loop_header
                  %s1306 = sphi 0, %s1308
                  %p1307 = scmp.ge.s32.totalorder %s1306, %s1299
                  %s1311 = sphi 0, %s1318
                  %s1312 = sphi %s1302, %s1321
                  %s1313 = sphi %s1304, %s1322
                $region88: #{tpu_custom_call.1} parent=77 // loop_header_branch
                  %1310 = sbr.rel (%p1307) target = $region92
                $region89: #{tpu_custom_call.1} parent=77 // loop_body
                  %v1314 = vld [vmem:[%s1312] sm:$0xff]
                  %1315 = vst [vmem:[%s1313] sm:$0xff] %v1314
                  %s1316 = sadd.s32 1, %s1311
                  %p1317 = scmp.ge.s32.totalorder %s1316, %s1299
                  %s1318 = scalar_select %p1317, 0, %s1316
                  %s1319 = smul.u32 %s1318, 8
                  %s1320 = smul.u32 %s1318, 8
                  %s1321 = scalar_lea.vmem %s1302, %s1319 [#allocation2]
                  %s1322 = scalar_lea.vmem %s1304, %s1320
                $region90: #{tpu_custom_call.1} parent=77 // loop_footer
                  %s1308 = sadd.s32 %s1306, 1
                $region91: #{tpu_custom_call.1} parent=77 // loop_footer_branch
                  %1305 = sbr.rel target = $region87
                $region92: #{tpu_custom_call.1} parent=77 // loop_exit
                  _
              $region78: #{tpu_custom_call.1} parent=55 // pred_fallthru
                _
              // Predicated region
              $region93: #{tpu_custom_call.1} parent=55 // pred_check
                _
              $region94: #{tpu_custom_call.1} parent=55 // pred_check_branch
                %1324 = sbr.rel target = $region96
              $region95: #{tpu_custom_call.1} parent=55 // pred_region
                _
              $region96: #{tpu_custom_call.1} parent=55 // pred_fallthru
                _
            $region56: #{tpu_custom_call.1} parent=51 // pred_fallthru
              _
            // Predicated region
            $region57: #{tpu_custom_call.1} parent=51 // pred_check
              _
            $region58: #{tpu_custom_call.1} parent=51 // pred_check_branch
              %1171 = sbr.rel target = $region60
            $region59: #{tpu_custom_call.1} parent=51 // pred_region
              %s1173 = sshrl.u32 %s1160, 4
              // While loop
              $region61: #{tpu_custom_call.1} parent=59 // loop_pre_header
                _
              $region62: #{tpu_custom_call.1} parent=59 // loop_header
                %s1175 = sphi 0, %s1177
                %p1176 = scmp.ge.s32.totalorder %s1175, %s1173
                %s1180 = sphi 0, %s1217
                %s1181 = sphi %s1153, %s1220
                %s1182 = sphi %s1164, %s1221
              $region63: #{tpu_custom_call.1} parent=59 // loop_header_branch
                %1179 = sbr.rel (%p1176) target = $region67
              $region64: #{tpu_custom_call.1} parent=59 // loop_body
                %v1183 = vld [vmem:[%s1181] sm:$0xff]
                %1184 = vst [vmem:[%s1182] sm:$0xff] %v1183
                %v1185 = vld [vmem:[%s1181 + $0x8] sm:$0xff]
                %1186 = vst [vmem:[%s1182 + $0x8] sm:$0xff] %v1185
                %v1187 = vld [vmem:[%s1181 + $0x10] sm:$0xff]
                %1188 = vst [vmem:[%s1182 + $0x10] sm:$0xff] %v1187
                %v1189 = vld [vmem:[%s1181 + $0x18] sm:$0xff]
                %1190 = vst [vmem:[%s1182 + $0x18] sm:$0xff] %v1189
                %v1191 = vld [vmem:[%s1181 + $0x20] sm:$0xff]
                %1192 = vst [vmem:[%s1182 + $0x20] sm:$0xff] %v1191
                %v1193 = vld [vmem:[%s1181 + $0x28] sm:$0xff]
                %1194 = vst [vmem:[%s1182 + $0x28] sm:$0xff] %v1193
                %v1195 = vld [vmem:[%s1181 + $0x30] sm:$0xff]
                %1196 = vst [vmem:[%s1182 + $0x30] sm:$0xff] %v1195
                %v1197 = vld [vmem:[%s1181 + $0x38] sm:$0xff]
                %1198 = vst [vmem:[%s1182 + $0x38] sm:$0xff] %v1197
                %v1199 = vld [vmem:[%s1181 + $0x40] sm:$0xff]
                %1200 = vst [vmem:[%s1182 + $0x40] sm:$0xff] %v1199
                %v1201 = vld [vmem:[%s1181 + $0x48] sm:$0xff]
                %1202 = vst [vmem:[%s1182 + $0x48] sm:$0xff] %v1201
                %v1203 = vld [vmem:[%s1181 + $0x50] sm:$0xff]
                %1204 = vst [vmem:[%s1182 + $0x50] sm:$0xff] %v1203
                %v1205 = vld [vmem:[%s1181 + $0x58] sm:$0xff]
                %1206 = vst [vmem:[%s1182 + $0x58] sm:$0xff] %v1205
                %v1207 = vld [vmem:[%s1181 + $0x60] sm:$0xff]
                %1208 = vst [vmem:[%s1182 + $0x60] sm:$0xff] %v1207
                %v1209 = vld [vmem:[%s1181 + $0x68] sm:$0xff]
                %1210 = vst [vmem:[%s1182 + $0x68] sm:$0xff] %v1209
                %v1211 = vld [vmem:[%s1181 + $0x70] sm:$0xff]
                %1212 = vst [vmem:[%s1182 + $0x70] sm:$0xff] %v1211
                %v1213 = vld [vmem:[%s1181 + $0x78] sm:$0xff]
                %1214 = vst [vmem:[%s1182 + $0x78] sm:$0xff] %v1213
                %s1215 = sadd.s32 1, %s1180
                %p1216 = scmp.ge.s32.totalorder %s1215, %s1173
                %s1217 = scalar_select %p1216, 0, %s1215
                %s1218 = smul.u32 %s1217, 128
                %s1219 = smul.u32 %s1217, 128
                %s1220 = scalar_lea.vmem %s1153, %s1218 [#allocation2]
                %s1221 = scalar_lea.vmem %s1164, %s1219
              $region65: #{tpu_custom_call.1} parent=59 // loop_footer
                %s1177 = sadd.s32 %s1175, 1
              $region66: #{tpu_custom_call.1} parent=59 // loop_footer_branch
                %1174 = sbr.rel target = $region62
              $region67: #{tpu_custom_call.1} parent=59 // loop_exit
                _
              %s1222 = sshrl.u32 %s1160, 4
              %s1223 = sand.u32 %s1160, 15
              %s1224 = smul.u32 %s1222, 16
              %s1225 = smul.u32 8, %s1224
              %s1226 = scalar_lea.vmem %s1153, %s1225 [#allocation2]
              %s1227 = smul.u32 8, %s1224
              %s1228 = scalar_lea.vmem %s1164, %s1227
              // While loop
              $region68: #{tpu_custom_call.1} parent=59 // loop_pre_header
                _
              $region69: #{tpu_custom_call.1} parent=59 // loop_header
                %s1230 = sphi 0, %s1232
                %p1231 = scmp.ge.s32.totalorder %s1230, %s1223
                %s1235 = sphi 0, %s1242
                %s1236 = sphi %s1226, %s1245
                %s1237 = sphi %s1228, %s1246
              $region70: #{tpu_custom_call.1} parent=59 // loop_header_branch
                %1234 = sbr.rel (%p1231) target = $region74
              $region71: #{tpu_custom_call.1} parent=59 // loop_body
                %v1238 = vld [vmem:[%s1236] sm:$0xff]
                %1239 = vst [vmem:[%s1237] sm:$0xff] %v1238
                %s1240 = sadd.s32 1, %s1235
                %p1241 = scmp.ge.s32.totalorder %s1240, %s1223
                %s1242 = scalar_select %p1241, 0, %s1240
                %s1243 = smul.u32 %s1242, 8
                %s1244 = smul.u32 %s1242, 8
                %s1245 = scalar_lea.vmem %s1226, %s1243 [#allocation2]
                %s1246 = scalar_lea.vmem %s1228, %s1244
              $region72: #{tpu_custom_call.1} parent=59 // loop_footer
                %s1232 = sadd.s32 %s1230, 1
              $region73: #{tpu_custom_call.1} parent=59 // loop_footer_branch
                %1229 = sbr.rel target = $region69
              $region74: #{tpu_custom_call.1} parent=59 // loop_exit
                _
            $region60: #{tpu_custom_call.1} parent=51 // pred_fallthru
              _
          $region52: #{tpu_custom_call.1} parent=47 // pred_fallthru
            _
          %1325 = vnop
        $region48: #{tpu_custom_call.1} parent=43 // pred_fallthru
          _
      $region44: #{tpu_custom_call.1} parent=5 // pred_fallthru
        _
      %p1326 = scmp.le.s32.totalorder 2, %s12
      // Predicated region
      $region97: #{tpu_custom_call.1} parent=5 // pred_check
        %p1327 = pneg %p1326
      $region98: #{tpu_custom_call.1} parent=5 // pred_check_branch
        %1329 = sbr.rel (%p1327) target = $region100
      $region99: #{tpu_custom_call.1} parent=5 // pred_region
        %s1330 = ssub.s32 %s12, 2
        // Predicated region
        $region101: #{tpu_custom_call.1} parent=99 // pred_check
          %p1331 = pneg %p172
        $region102: #{tpu_custom_call.1} parent=99 // pred_check_branch
          %1333 = sbr.rel (%p1331) target = $region104
        $region103: #{tpu_custom_call.1} parent=99 // pred_region
          %s1334 = sand.u32 %s157, 1
          %s1335 = sand.u32 %s157, 1
          %s1336 = smul.addr %s1335, 128
          %s1337 = scalar_lea.vmem [#allocation2], %s1336
        $region104: #{tpu_custom_call.1} parent=99 // pred_fallthru
          _
      $region100: #{tpu_custom_call.1} parent=5 // pred_fallthru
        _
    $region6: #{tpu_custom_call.1} parent=1 // loop_footer
      %s16 = sadd.s32 1, %s12
    $region7: #{tpu_custom_call.1} parent=1 // loop_footer_branch
      %11 = sbr.rel target = $region3
    $region8: #{tpu_custom_call.1} parent=1 // loop_exit
      _

</llo_original>
